<compile_context>
chip_gen: v7x
topology: tpu7x:2x2x1
jax: 0.10.0
libtpu: 0.0.40
codegen_flags: <defaults>
</compile_context>

<pallas_src>
import jax
import jax.numpy as jnp
from jax.experimental import pallas as pl
from jax.experimental.pallas import tpu as pltpu


def _round_up(x, m):
    return (x + m - 1) // m * m


def _mlp_kernel(x_ref,
                w1_ref, b1_ref,
                w2_ref, b2_ref,
                w3_ref, b3_ref,
                w4_ref, b4_ref,
                o_ref):
    # x_ref holds [flattened image | preds | zero padding] in bf16, so the
    # PyTorch concat is folded into the single layer-1 matmul.
    x = x_ref[...]

    # Layer 1: Linear(n_inputs, 500) + Tanh
    z1 = jnp.dot(x, w1_ref[...], preferred_element_type=jnp.float32) + b1_ref[...]
    h1 = jnp.tanh(z1.astype(jnp.bfloat16))          # bf16 EUP path, feeds next dot

    # Layer 2: Linear(500, 100) + Tanh
    z2 = jnp.dot(h1, w2_ref[...], preferred_element_type=jnp.float32) + b2_ref[...]
    h2 = jnp.tanh(z2.astype(jnp.bfloat16))

    # Layer 3: Linear(100, 500) + Tanh
    z3 = jnp.dot(h2, w3_ref[...], preferred_element_type=jnp.float32) + b3_ref[...]
    h3 = jnp.tanh(z3.astype(jnp.bfloat16))

    # Layer 4: Linear(500, n_inputs - 10) + Sigmoid
    z4 = jnp.dot(h3, w4_ref[...], preferred_element_type=jnp.float32) + b4_ref[...]
    o_ref[...] = jax.nn.sigmoid(z4.astype(jnp.bfloat16)).astype(o_ref.dtype)


def one_net_gen_forward(x, preds, params, *, tb=None):
    """x: (B, C, H, W) float32 (NCHW, like PyTorch); preds: (B, 10)."""
    b = x.shape[0]
    flat = x.reshape(b, -1)                       # torch.flatten(x, 1)
    n_img = flat.shape[1]
    n_pred = preds.shape[1]
    n_in = n_img + n_pred                         # concat width

    (w1, b1), (w2, b2), (w3, b3), (w4, b4) = params  # (in_features, out_features)
    n_out = w4.shape[1]

    # Lane / MXU friendly padded widths.
    H1, H2, H3 = 512, 128, 512
    n_in_pad = _round_up(n_in, 128)
    n_out_pad = _round_up(n_out, 128)

    def pad_to(a, shape, dtype):
        out = jnp.zeros(shape, dtype)
        return out.at[:a.shape[0], :a.shape[1]].set(a.astype(dtype))

    # Single padded W1 covers image rows AND preds rows (concat folded in).
    w1p = pad_to(w1, (n_in_pad, H1), jnp.bfloat16)
    b1p = pad_to(b1, (1, H1), jnp.float32)
    w2p = pad_to(w2, (H1, H2), jnp.bfloat16)
    b2p = pad_to(b2, (1, H2), jnp.float32)
    w3p = pad_to(w3, (H2, H3), jnp.bfloat16)
    b3p = pad_to(b3, (1, H3), jnp.float32)
    w4p = pad_to(w4, (H3, n_out_pad), jnp.bfloat16)
    b4p = pad_to(b4, (1, n_out_pad), jnp.float32)

    weight_bytes = 2 * int(w1p.size + w2p.size + w3p.size + w4p.size)  # bf16
    bias_bytes = 4 * int(b1p.size + b2p.size + b3p.size + b4p.size)    # f32

    def vmem_estimate(t):
        resident = 2 * (weight_bytes + bias_bytes)      # constant-index blocks are
        in_tiles = 2 * t * n_in_pad * 2                 # still double-buffered
        out_tiles = 2 * t * n_out_pad * 4
        live = 2 * t * (H1 + H2 + H3 + n_out_pad) * 4   # f32 intermediates slack
        return resident + in_tiles + out_tiles + live

    if tb is None:
        # >= 2 grid steps whenever the batch allows it (v7x megacore sharding),
        # capped at 512 rows and shrunk to fit a conservative VMEM budget.
        budget = 40 << 20
        tb = min(512, max(16, _round_up(-(-b // 2), 16)))
        while tb > 16 and vmem_estimate(tb) > budget:
            tb -= 16
    tb = max(16, _round_up(tb, 16))                     # bf16 sublane minimum
    b_pad = _round_up(b, tb)

    # Fuse flatten + concat + bf16 cast + pad into one wrapper pass.
    cat = jnp.concatenate(
        [flat.astype(jnp.bfloat16), preds.astype(jnp.bfloat16)], axis=1)
    if b_pad == b and n_in_pad == n_in:
        xin = cat                                        # fast path: already aligned
    else:
        xin = jnp.zeros((b_pad, n_in_pad), jnp.bfloat16).at[:b, :n_in].set(cat)

    grid = (b_pad // tb,)

    def resident(arr):
        # Full-array block with constant index map -> fetched once, stays
        # VMEM-resident across all batch tiles.
        return pl.BlockSpec(arr.shape, lambda i: (0, 0))

    flops = 2 * b_pad * (n_in_pad * H1 + H1 * H2 + H2 * H3 + H3 * n_out_pad)
    transcendentals = b_pad * (H1 + H2 + H3 + n_out_pad)
    bytes_accessed = (int(xin.size) * 2 + b_pad * n_out_pad * 4
                      + weight_bytes + bias_bytes)

    est = vmem_estimate(tb)
    vmem_limit = int(min(max(32 << 20, est * 5 // 4), 64 << 20))

    out_padded = pl.pallas_call(
        _mlp_kernel,
        out_shape=jax.ShapeDtypeStruct((b_pad, n_out_pad), jnp.float32),
        grid=grid,
        in_specs=[
            pl.BlockSpec((tb, n_in_pad), lambda i: (i, 0)),
            resident(w1p), resident(b1p),
            resident(w2p), resident(b2p),
            resident(w3p), resident(b3p),
            resident(w4p), resident(b4p),
        ],
        out_specs=pl.BlockSpec((tb, n_out_pad), lambda i: (i, 0)),
        compiler_params=pltpu.CompilerParams(
            dimension_semantics=("parallel",),
            vmem_limit_bytes=vmem_limit),
        cost_estimate=pl.CostEstimate(
            flops=int(flops),
            transcendentals=int(transcendentals),
            bytes_accessed=int(bytes_accessed)),
    )(xin, w1p, b1p, w2p, b2p, w3p, b3p, w4p, b4p)

    return out_padded[:b, :n_out]


def init_params(key, n_inputs):
    """Deterministic init mirroring nn.Linear default (U(-1/sqrt(fan_in), ...)).
    Weights are stored as (in_features, out_features)."""
    dims = [(n_inputs, 500), (500, 100), (100, 500), (500, n_inputs - 10)]
    params = []
    for (fan_in, fan_out) in dims:
        key, kw, kb = jax.random.split(key, 3)
        bound = 1.0 / jnp.sqrt(fan_in)
        w = jax.random.uniform(kw, (fan_in, fan_out), jnp.float32,
                               minval=-bound, maxval=bound)
        bb = jax.random.uniform(kb, (1, fan_out), jnp.float32,
                                minval=-bound, maxval=bound)
        params.append((w, bb))
    return params


def reference_forward(x, preds, params):
    """Pure-JAX f32 reference for correctness checking."""
    b = x.shape[0]
    h = jnp.concatenate([x.reshape(b, -1), preds], axis=1)
    (w1, b1), (w2, b2), (w3, b3), (w4, b4) = params
    h = jnp.tanh(h @ w1 + b1)
    h = jnp.tanh(h @ w2 + b2)
    h = jnp.tanh(h @ w3 + b3)
    return jax.nn.sigmoid(h @ w4 + b4)


if __name__ == "__main__":
    key = jax.random.PRNGKey(0)
    k_x, k_p, k_w, k_x2, k_p2 = jax.random.split(key, 5)

    # Small shapes consistent with the module: image (B, C, H, W), preds (B, 10)
    B, C, H, W = 2, 3, 8, 8
    x = jax.random.normal(k_x, (B, C, H, W), jnp.float32)
    preds = jax.nn.softmax(jax.random.normal(k_p, (B, 10), jnp.float32), axis=-1)

    n_inputs = C * H * W + 10  # flattened image + 10 prediction logits
    params = init_params(k_w, n_inputs)

    out = jax.block_until_ready(one_net_gen_forward(x, preds, params))
    ref = reference_forward(x, preds, params)
    assert out.shape == (B, n_inputs - 10)
    # bf16 matmuls + bf16 activations vs f32 reference -> loosened tolerance.
    assert jnp.allclose(out, ref, atol=3e-2), float(jnp.max(jnp.abs(out - ref)))

    # Exercise the multi-tile batch grid (2 tiles of 16 rows) at small shapes.
    B2 = 24
    x2 = jax.random.normal(k_x2, (B2, C, H, W), jnp.float32)
    preds2 = jax.nn.softmax(jax.random.normal(k_p2, (B2, 10), jnp.float32),
                            axis=-1)
    out2 = jax.block_until_ready(
        one_net_gen_forward(x2, preds2, params, tb=16))
    ref2 = reference_forward(x2, preds2, params)
    assert out2.shape == (B2, n_inputs - 10)
    assert jnp.allclose(out2, ref2, atol=3e-2), \
        float(jnp.max(jnp.abs(out2 - ref2)))

    print("KERNEL_OK")
</pallas_src>

<mosaic_0001>
module attributes {stable_mosaic.version = 11 : i64} {
  func.func @_mlp_kernel(%arg0: i32, %arg1: memref<16x256xbf16, #tpu.memory_space<vmem>>, %arg2: memref<256x512xbf16, #tpu.memory_space<vmem>>, %arg3: memref<1x512xf32, #tpu.memory_space<vmem>>, %arg4: memref<512x128xbf16, #tpu.memory_space<vmem>>, %arg5: memref<1x128xf32, #tpu.memory_space<vmem>>, %arg6: memref<128x512xbf16, #tpu.memory_space<vmem>>, %arg7: memref<1x512xf32, #tpu.memory_space<vmem>>, %arg8: memref<512x256xbf16, #tpu.memory_space<vmem>>, %arg9: memref<1x256xf32, #tpu.memory_space<vmem>>, %arg10: memref<16x256xf32, #tpu.memory_space<vmem>>) attributes {dimension_semantics = [#tpu.dimension_semantics<parallel>], iteration_bounds = array<i64: 1>, scalar_prefetch = 0 : i64, scratch_operands = 0 : i64, tpu.core_type = #tpu.core_type<tc>, window_params = [{transform_indices = @transform_0, window_bounds = array<i64: 16, 256>}, {pipeline_mode = #tpu.pipeline_mode<synchronous>, transform_indices = @transform_1, window_bounds = array<i64: 256, 512>}, {pipeline_mode = #tpu.pipeline_mode<synchronous>, transform_indices = @transform_2, window_bounds = array<i64: 1, 512>}, {pipeline_mode = #tpu.pipeline_mode<synchronous>, transform_indices = @transform_3, window_bounds = array<i64: 512, 128>}, {pipeline_mode = #tpu.pipeline_mode<synchronous>, transform_indices = @transform_4, window_bounds = array<i64: 1, 128>}, {pipeline_mode = #tpu.pipeline_mode<synchronous>, transform_indices = @transform_5, window_bounds = array<i64: 128, 512>}, {pipeline_mode = #tpu.pipeline_mode<synchronous>, transform_indices = @transform_6, window_bounds = array<i64: 1, 512>}, {pipeline_mode = #tpu.pipeline_mode<synchronous>, transform_indices = @transform_7, window_bounds = array<i64: 512, 256>}, {pipeline_mode = #tpu.pipeline_mode<synchronous>, transform_indices = @transform_8, window_bounds = array<i64: 1, 256>}, {transform_indices = @transform_9, window_bounds = array<i64: 16, 256>}]} {
    %c0 = arith.constant 0 : index
    %c0_0 = arith.constant 0 : index
    %0 = vector.load %arg1[%c0, %c0_0] : memref<16x256xbf16, #tpu.memory_space<vmem>>, vector<16x256xbf16>
    %c0_1 = arith.constant 0 : index
    %c0_2 = arith.constant 0 : index
    %1 = vector.load %arg2[%c0_1, %c0_2] : memref<256x512xbf16, #tpu.memory_space<vmem>>, vector<256x512xbf16>
    %cst = arith.constant dense<0.000000e+00> : vector<16x512xf32>
    %2 = tpu.matmul %0, %1, %cst {dimension_numbers = #tpu.dot_dimension_numbers<[1], [0], [0], [1], [0, 0, 1, 1], [], []>} : vector<16x256xbf16>, vector<256x512xbf16>, vector<16x512xf32> -> vector<16x512xf32>
    %c0_3 = arith.constant 0 : index
    %c0_4 = arith.constant 0 : index
    %3 = vector.load %arg3[%c0_3, %c0_4] : memref<1x512xf32, #tpu.memory_space<vmem>>, vector<1x512xf32>
    %4 = vector.broadcast %3 : vector<1x512xf32> to vector<16x512xf32>
    %5 = arith.addf %2, %4 : vector<16x512xf32>
    %6 = arith.truncf %5 : vector<16x512xf32> to vector<16x512xbf16>
    %7 = math.tanh %6 : vector<16x512xbf16>
    %c0_5 = arith.constant 0 : index
    %c0_6 = arith.constant 0 : index
    %8 = vector.load %arg4[%c0_5, %c0_6] : memref<512x128xbf16, #tpu.memory_space<vmem>>, vector<512x128xbf16>
    %cst_7 = arith.constant dense<0.000000e+00> : vector<16x128xf32>
    %9 = tpu.matmul %7, %8, %cst_7 {dimension_numbers = #tpu.dot_dimension_numbers<[1], [0], [0], [1], [0, 0, 1, 1], [], []>} : vector<16x512xbf16>, vector<512x128xbf16>, vector<16x128xf32> -> vector<16x128xf32>
    %c0_8 = arith.constant 0 : index
    %c0_9 = arith.constant 0 : index
    %10 = vector.load %arg5[%c0_8, %c0_9] : memref<1x128xf32, #tpu.memory_space<vmem>>, vector<1x128xf32>
    %11 = vector.broadcast %10 : vector<1x128xf32> to vector<16x128xf32>
    %12 = arith.addf %9, %11 : vector<16x128xf32>
    %13 = arith.truncf %12 : vector<16x128xf32> to vector<16x128xbf16>
    %14 = math.tanh %13 : vector<16x128xbf16>
    %c0_10 = arith.constant 0 : index
    %c0_11 = arith.constant 0 : index
    %15 = vector.load %arg6[%c0_10, %c0_11] : memref<128x512xbf16, #tpu.memory_space<vmem>>, vector<128x512xbf16>
    %cst_12 = arith.constant dense<0.000000e+00> : vector<16x512xf32>
    %16 = tpu.matmul %14, %15, %cst_12 {dimension_numbers = #tpu.dot_dimension_numbers<[1], [0], [0], [1], [0, 0, 1, 1], [], []>} : vector<16x128xbf16>, vector<128x512xbf16>, vector<16x512xf32> -> vector<16x512xf32>
    %c0_13 = arith.constant 0 : index
    %c0_14 = arith.constant 0 : index
    %17 = vector.load %arg7[%c0_13, %c0_14] : memref<1x512xf32, #tpu.memory_space<vmem>>, vector<1x512xf32>
    %18 = vector.broadcast %17 : vector<1x512xf32> to vector<16x512xf32>
    %19 = arith.addf %16, %18 : vector<16x512xf32>
    %20 = arith.truncf %19 : vector<16x512xf32> to vector<16x512xbf16>
    %21 = math.tanh %20 : vector<16x512xbf16>
    %c0_15 = arith.constant 0 : index
    %c0_16 = arith.constant 0 : index
    %22 = vector.load %arg8[%c0_15, %c0_16] : memref<512x256xbf16, #tpu.memory_space<vmem>>, vector<512x256xbf16>
    %cst_17 = arith.constant dense<0.000000e+00> : vector<16x256xf32>
    %23 = tpu.matmul %21, %22, %cst_17 {dimension_numbers = #tpu.dot_dimension_numbers<[1], [0], [0], [1], [0, 0, 1, 1], [], []>} : vector<16x512xbf16>, vector<512x256xbf16>, vector<16x256xf32> -> vector<16x256xf32>
    %c0_18 = arith.constant 0 : index
    %c0_19 = arith.constant 0 : index
    %24 = vector.load %arg9[%c0_18, %c0_19] : memref<1x256xf32, #tpu.memory_space<vmem>>, vector<1x256xf32>
    %25 = vector.broadcast %24 : vector<1x256xf32> to vector<16x256xf32>
    %26 = arith.addf %23, %25 : vector<16x256xf32>
    %27 = arith.truncf %26 : vector<16x256xf32> to vector<16x256xbf16>
    %28 = arith.negf %27 : vector<16x256xbf16>
    %29 = math.exp %28 : vector<16x256xbf16>
    %cst_20 = arith.constant 1.000000e+00 : bf16
    %30 = vector.broadcast %cst_20 : bf16 to vector<16x256xbf16>
    %31 = arith.addf %30, %29 : vector<16x256xbf16>
    %32 = arith.divf %30, %31 : vector<16x256xbf16>
    %33 = arith.extf %32 : vector<16x256xbf16> to vector<16x256xf32>
    %c0_21 = arith.constant 0 : index
    %c0_22 = arith.constant 0 : index
    %34 = vector.load %arg10[%c0_21, %c0_22] : memref<16x256xf32, #tpu.memory_space<vmem>>, vector<16x256xf32>
    tpu.vector_store %arg10[%c0_21, %c0_22], %33 {strides = array<i32>} : memref<16x256xf32, #tpu.memory_space<vmem>>, vector<16x256xf32>,
    return
  }
  func.func @transform_0(%arg0: i32) -> (i32, i32) {
    %c0_i32 = arith.constant 0 : i32
    %c0_i32_0 = arith.constant 0 : i32
    return %arg0, %c0_i32 : i32, i32
  }
  func.func @transform_1(%arg0: i32) -> (i32, i32) {
    %c0_i32 = arith.constant 0 : i32
    %c0_i32_0 = arith.constant 0 : i32
    %c0_i32_1 = arith.constant 0 : i32
    return %c0_i32, %c0_i32_0 : i32, i32
  }
  func.func @transform_2(%arg0: i32) -> (i32, i32) {
    %c0_i32 = arith.constant 0 : i32
    %c0_i32_0 = arith.constant 0 : i32
    %c0_i32_1 = arith.constant 0 : i32
    return %c0_i32, %c0_i32_0 : i32, i32
  }
  func.func @transform_3(%arg0: i32) -> (i32, i32) {
    %c0_i32 = arith.constant 0 : i32
    %c0_i32_0 = arith.constant 0 : i32
    %c0_i32_1 = arith.constant 0 : i32
    return %c0_i32, %c0_i32_0 : i32, i32
  }
  func.func @transform_4(%arg0: i32) -> (i32, i32) {
    %c0_i32 = arith.constant 0 : i32
    %c0_i32_0 = arith.constant 0 : i32
    %c0_i32_1 = arith.constant 0 : i32
    return %c0_i32, %c0_i32_0 : i32, i32
  }
  func.func @transform_5(%arg0: i32) -> (i32, i32) {
    %c0_i32 = arith.constant 0 : i32
    %c0_i32_0 = arith.constant 0 : i32
    %c0_i32_1 = arith.constant 0 : i32
    return %c0_i32, %c0_i32_0 : i32, i32
  }
  func.func @transform_6(%arg0: i32) -> (i32, i32) {
    %c0_i32 = arith.constant 0 : i32
    %c0_i32_0 = arith.constant 0 : i32
    %c0_i32_1 = arith.constant 0 : i32
    return %c0_i32, %c0_i32_0 : i32, i32
  }
  func.func @transform_7(%arg0: i32) -> (i32, i32) {
    %c0_i32 = arith.constant 0 : i32
    %c0_i32_0 = arith.constant 0 : i32
    %c0_i32_1 = arith.constant 0 : i32
    return %c0_i32, %c0_i32_0 : i32, i32
  }
  func.func @transform_8(%arg0: i32) -> (i32, i32) {
    %c0_i32 = arith.constant 0 : i32
    %c0_i32_0 = arith.constant 0 : i32
    %c0_i32_1 = arith.constant 0 : i32
    return %c0_i32, %c0_i32_0 : i32, i32
  }
  func.func @transform_9(%arg0: i32) -> (i32, i32) {
    %c0_i32 = arith.constant 0 : i32
    %c0_i32_0 = arith.constant 0 : i32
    return %arg0, %c0_i32 : i32, i32
  }
}

</mosaic_0001>

<llo_original>
// kernel: tpu_custom_call.1
$region0: #{tpu_custom_call.1}
  #allocation0 [shape = 'u32[]', space=smem, size = 0x4, offset = 0x4, fixed_abs, tag = 'smem constant byte address 0x4 - core index']
  #allocation1 [shape = 'u32[144,128]{1,0:T(1,128)}', space=vmem, size = 0x12000, scoped, tag = 'internal scratch']
  %s0 = inlined_call_operand.hbm [shape: bf16[16,256], index: 0, kind: input, shape index: {}]
  %s1 = inlined_call_operand.hbm [shape: bf16[256,512], index: 1, kind: input, shape index: {}]
  %s2 = inlined_call_operand.vmem [shape: f32[1,512], index: 2, kind: input, shape index: {}]
  %s3 = inlined_call_operand.hbm [shape: bf16[512,128], index: 3, kind: input, shape index: {}]
  %s4 = inlined_call_operand.vmem [shape: f32[1,128], index: 4, kind: input, shape index: {}]
  %s5 = inlined_call_operand.hbm [shape: bf16[128,512], index: 5, kind: input, shape index: {}]
  %s6 = inlined_call_operand.vmem [shape: f32[1,512], index: 6, kind: input, shape index: {}]
  %s7 = inlined_call_operand.hbm [shape: bf16[512,256], index: 7, kind: input, shape index: {}]
  %s8 = inlined_call_operand.vmem [shape: f32[1,256], index: 8, kind: input, shape index: {}]
  %s9 = inlined_call_operand.hbm [shape: f32[16,256], index: 9, kind: output, shape index: {}]
  %s10 = sld [smem:[#allocation0]]
  $region66: #{tpu_custom_call.1} parent=0
    _
  %s12 = ssub.s32 1, %s10
  %s13 = scalar_select 0, %s12, %s10
  $region1: #{tpu_custom_call.1} parent=0
    #allocation2 [shape = 'u8[8192]{0}', space=vmem, size = 0x2000, scoped, tag = 'input window, operand 0, single buffered']
    #allocation3 [shape = 's32[1]{0}', space=sflag, size = 0x4, scoped, tag = 'scoped memory for tpu_custom_call.1']
    #allocation4 [shape = 's32[1]{0}', space=sflag, size = 0x4, scoped, tag = 'scoped memory for tpu_custom_call.1']
    #allocation5 [shape = 'u8[262144]{0}', space=vmem, size = 0x40000, scoped, tag = 'input window, operand 1, single buffered']
    #allocation6 [shape = 's32[1]{0}', space=sflag, size = 0x4, scoped, tag = 'scoped memory for tpu_custom_call.1']
    #allocation7 [shape = 'u8[131072]{0}', space=vmem, size = 0x20000, scoped, tag = 'input window, operand 3, single buffered']
    #allocation8 [shape = 'u8[131072]{0}', space=vmem, size = 0x20000, scoped, tag = 'input window, operand 5, single buffered']
    #allocation9 [shape = 's32[1]{0}', space=sflag, size = 0x4, scoped, tag = 'scoped memory for tpu_custom_call.1']
    #allocation10 [shape = 'u8[262144]{0}', space=vmem, size = 0x40000, scoped, tag = 'input window, operand 7, single buffered']
    #allocation11 [shape = 'u8[16384]{0}', space=vmem, size = 0x4000, scoped, tag = 'output window, operand 0, single buffered']
    %14 = vsyncpa [#allocation3], 0
    %15 = vsyncpa [#allocation6], 0
    %16 = vsyncpa [#allocation9], 0
    %17 = vsyncpa [#allocation4], 0
    // Predicated region
    $region2: #{tpu_custom_call.1} parent=1 // pred_check
      _
    $region3: #{tpu_custom_call.1} parent=1 // pred_check_branch
      %19 = sbr.rel (0) target = $region5
    $region4: #{tpu_custom_call.1} parent=1 // pred_region
      %s21 = ssub.s32 256, 256
      %22 = vsyncadd [#allocation3], %s21
      %s23 = sshll.u32 [#allocation2], 4
      %s24 = int_to_ptr.vmem [resolvable:$true] %s23
      %29 = dma.hbm_to_vmem [thread:$0]  %s0, 256, %s24, [#allocation3], 128, 128, 8
    $region5: #{tpu_custom_call.1} parent=1 // pred_fallthru
      _
    // Predicated region
    $region6: #{tpu_custom_call.1} parent=1 // pred_check
      _
    $region7: #{tpu_custom_call.1} parent=1 // pred_check_branch
      %31 = sbr.rel (0) target = $region9
    $region8: #{tpu_custom_call.1} parent=1 // pred_region
      %s33 = ssub.s32 8192, 8192
      %34 = vsyncadd [#allocation6], %s33
      %s35 = sshll.u32 [#allocation5], 4
      %s36 = int_to_ptr.vmem [resolvable:$true] %s35
      %41 = dma.hbm_to_vmem [thread:$0]  %s1, 8192, %s36, [#allocation6], 256, 256, 16
    $region9: #{tpu_custom_call.1} parent=1 // pred_fallthru
      _
    // Predicated region
    $region10: #{tpu_custom_call.1} parent=1 // pred_check
      _
    $region11: #{tpu_custom_call.1} parent=1 // pred_check_branch
      %43 = sbr.rel (0) target = $region13
    $region12: #{tpu_custom_call.1} parent=1 // pred_region
      _
    $region13: #{tpu_custom_call.1} parent=1 // pred_fallthru
      _
    // Predicated region
    $region14: #{tpu_custom_call.1} parent=1 // pred_check
      _
    $region15: #{tpu_custom_call.1} parent=1 // pred_check_branch
      %45 = sbr.rel (0) target = $region17
    $region16: #{tpu_custom_call.1} parent=1 // pred_region
      %s47 = ssub.s32 4096, 4096
      %48 = vsyncadd [#allocation6], %s47
      %s49 = sshll.u32 [#allocation7], 4
      %s50 = int_to_ptr.vmem [resolvable:$true] %s49
      %55 = dma.hbm_to_vmem [thread:$0]  %s3, 4096, %s50, [#allocation6], 64, 64, 4
    $region17: #{tpu_custom_call.1} parent=1 // pred_fallthru
      _
    // Predicated region
    $region18: #{tpu_custom_call.1} parent=1 // pred_check
      _
    $region19: #{tpu_custom_call.1} parent=1 // pred_check_branch
      %57 = sbr.rel (0) target = $region21
    $region20: #{tpu_custom_call.1} parent=1 // pred_region
      _
    $region21: #{tpu_custom_call.1} parent=1 // pred_fallthru
      _
    // Predicated region
    $region22: #{tpu_custom_call.1} parent=1 // pred_check
      _
    $region23: #{tpu_custom_call.1} parent=1 // pred_check_branch
      %59 = sbr.rel (0) target = $region25
    $region24: #{tpu_custom_call.1} parent=1 // pred_region
      %s61 = ssub.s32 4096, 4096
      %62 = vsyncadd [#allocation9], %s61
      %s63 = sshll.u32 [#allocation8], 4
      %s64 = int_to_ptr.vmem [resolvable:$true] %s63
      %69 = dma.hbm_to_vmem [thread:$0]  %s5, 4096, %s64, [#allocation9], 256, 256, 16
    $region25: #{tpu_custom_call.1} parent=1 // pred_fallthru
      _
    // Predicated region
    $region26: #{tpu_custom_call.1} parent=1 // pred_check
      _
    $region27: #{tpu_custom_call.1} parent=1 // pred_check_branch
      %71 = sbr.rel (0) target = $region29
    $region28: #{tpu_custom_call.1} parent=1 // pred_region
      _
    $region29: #{tpu_custom_call.1} parent=1 // pred_fallthru
      _
    // Predicated region
    $region30: #{tpu_custom_call.1} parent=1 // pred_check
      _
    $region31: #{tpu_custom_call.1} parent=1 // pred_check_branch
      %73 = sbr.rel (0) target = $region33
    $region32: #{tpu_custom_call.1} parent=1 // pred_region
      %s75 = ssub.s32 8192, 8192
      %76 = vsyncadd [#allocation9], %s75
      %s77 = sshll.u32 [#allocation10], 4
      %s78 = int_to_ptr.vmem [resolvable:$true] %s77
      %83 = dma.hbm_to_vmem [thread:$0]  %s7, 8192, %s78, [#allocation9], 128, 128, 8
    $region33: #{tpu_custom_call.1} parent=1 // pred_fallthru
      _
    // Predicated region
    $region34: #{tpu_custom_call.1} parent=1 // pred_check
      _
    $region35: #{tpu_custom_call.1} parent=1 // pred_check_branch
      %85 = sbr.rel (0) target = $region37
    $region36: #{tpu_custom_call.1} parent=1 // pred_region
      _
    $region37: #{tpu_custom_call.1} parent=1 // pred_fallthru
      _
    // Predicated region
    $region38: #{tpu_custom_call.1} parent=1 // pred_check
      _
    $region39: #{tpu_custom_call.1} parent=1 // pred_check_branch
      %87 = sbr.rel (0) target = $region41
    $region40: #{tpu_custom_call.1} parent=1 // pred_region
      %88 = dma.done [#allocation3], 256
    $region41: #{tpu_custom_call.1} parent=1 // pred_fallthru
      _
    // Predicated region
    $region42: #{tpu_custom_call.1} parent=1 // pred_check
      _
    $region43: #{tpu_custom_call.1} parent=1 // pred_check_branch
      %90 = sbr.rel (0) target = $region45
    $region44: #{tpu_custom_call.1} parent=1 // pred_region
      %91 = dma.done [#allocation6], 8192
    $region45: #{tpu_custom_call.1} parent=1 // pred_fallthru
      _
    // Predicated region
    $region46: #{tpu_custom_call.1} parent=1 // pred_check
      _
    $region47: #{tpu_custom_call.1} parent=1 // pred_check_branch
      %93 = sbr.rel (0) target = $region49
    $region48: #{tpu_custom_call.1} parent=1 // pred_region
      %94 = dma.done [#allocation6], 4096
    $region49: #{tpu_custom_call.1} parent=1 // pred_fallthru
      _
    // Predicated region
    $region50: #{tpu_custom_call.1} parent=1 // pred_check
      _
    $region51: #{tpu_custom_call.1} parent=1 // pred_check_branch
      %96 = sbr.rel (0) target = $region53
    $region52: #{tpu_custom_call.1} parent=1 // pred_region
      %97 = dma.done [#allocation9], 4096
    $region53: #{tpu_custom_call.1} parent=1 // pred_fallthru
      _
    // Predicated region
    $region54: #{tpu_custom_call.1} parent=1 // pred_check
      _
    $region55: #{tpu_custom_call.1} parent=1 // pred_check_branch
      %99 = sbr.rel (0) target = $region57
    $region56: #{tpu_custom_call.1} parent=1 // pred_region
      %100 = dma.done [#allocation9], 8192
    $region57: #{tpu_custom_call.1} parent=1 // pred_fallthru
      _
    %v103 = vld [vmem:[#allocation2] sm:$0xff]
    %v104 = vld [vmem:[#allocation2 + $0x8] sm:$0xff]
    %v105 = vld [vmem:[#allocation5] sm:$0xff]
    %v106 = vld [vmem:[#allocation5 + $0x8] sm:$0xff]
    %v107 = vld [vmem:[#allocation5 + $0x10] sm:$0xff]
    %v108 = vld [vmem:[#allocation5 + $0x18] sm:$0xff]
    %v109 = vld [vmem:[#allocation5 + $0x20] sm:$0xff]
    %v110 = vld [vmem:[#allocation5 + $0x28] sm:$0xff]
    %v111 = vld [vmem:[#allocation5 + $0x30] sm:$0xff]
    %v112 = vld [vmem:[#allocation5 + $0x38] sm:$0xff]
    %v113 = vld [vmem:[#allocation5 + $0x40] sm:$0xff]
    %v114 = vld [vmem:[#allocation5 + $0x48] sm:$0xff]
    %v115 = vld [vmem:[#allocation5 + $0x50] sm:$0xff]
    %v116 = vld [vmem:[#allocation5 + $0x58] sm:$0xff]
    %v117 = vld [vmem:[#allocation5 + $0x60] sm:$0xff]
    %v118 = vld [vmem:[#allocation5 + $0x68] sm:$0xff]
    %v119 = vld [vmem:[#allocation5 + $0x70] sm:$0xff]
    %v120 = vld [vmem:[#allocation5 + $0x78] sm:$0xff]
    %v121 = vld [vmem:[#allocation5 + $0x80] sm:$0xff]
    %v122 = vld [vmem:[#allocation5 + $0x88] sm:$0xff]
    %v123 = vld [vmem:[#allocation5 + $0x90] sm:$0xff]
    %v124 = vld [vmem:[#allocation5 + $0x98] sm:$0xff]
    %v125 = vld [vmem:[#allocation5 + $0xa0] sm:$0xff]
    %v126 = vld [vmem:[#allocation5 + $0xa8] sm:$0xff]
    %v127 = vld [vmem:[#allocation5 + $0xb0] sm:$0xff]
    %v128 = vld [vmem:[#allocation5 + $0xb8] sm:$0xff]
    %v129 = vld [vmem:[#allocation5 + $0xc0] sm:$0xff]
    %v130 = vld [vmem:[#allocation5 + $0xc8] sm:$0xff]
    %v131 = vld [vmem:[#allocation5 + $0xd0] sm:$0xff]
    %v132 = vld [vmem:[#allocation5 + $0xd8] sm:$0xff]
    %v133 = vld [vmem:[#allocation5 + $0xe0] sm:$0xff]
    %v134 = vld [vmem:[#allocation5 + $0xe8] sm:$0xff]
    %v135 = vld [vmem:[#allocation5 + $0xf0] sm:$0xff]
    %v136 = vld [vmem:[#allocation5 + $0xf8] sm:$0xff]
    %v137 = vld [vmem:[#allocation5 + $0x100] sm:$0xff]
    %v138 = vld [vmem:[#allocation5 + $0x108] sm:$0xff]
    %v139 = vld [vmem:[#allocation5 + $0x110] sm:$0xff]
    %v140 = vld [vmem:[#allocation5 + $0x118] sm:$0xff]
    %v141 = vld [vmem:[#allocation5 + $0x120] sm:$0xff]
    %v142 = vld [vmem:[#allocation5 + $0x128] sm:$0xff]
    %v143 = vld [vmem:[#allocation5 + $0x130] sm:$0xff]
    %v144 = vld [vmem:[#allocation5 + $0x138] sm:$0xff]
    %v145 = vld [vmem:[#allocation5 + $0x140] sm:$0xff]
    %v146 = vld [vmem:[#allocation5 + $0x148] sm:$0xff]
    %v147 = vld [vmem:[#allocation5 + $0x150] sm:$0xff]
    %v148 = vld [vmem:[#allocation5 + $0x158] sm:$0xff]
    %v149 = vld [vmem:[#allocation5 + $0x160] sm:$0xff]
    %v150 = vld [vmem:[#allocation5 + $0x168] sm:$0xff]
    %v151 = vld [vmem:[#allocation5 + $0x170] sm:$0xff]
    %v152 = vld [vmem:[#allocation5 + $0x178] sm:$0xff]
    %v153 = vld [vmem:[#allocation5 + $0x180] sm:$0xff]
    %v154 = vld [vmem:[#allocation5 + $0x188] sm:$0xff]
    %v155 = vld [vmem:[#allocation5 + $0x190] sm:$0xff]
    %v156 = vld [vmem:[#allocation5 + $0x198] sm:$0xff]
    %v157 = vld [vmem:[#allocation5 + $0x1a0] sm:$0xff]
    %v158 = vld [vmem:[#allocation5 + $0x1a8] sm:$0xff]
    %v159 = vld [vmem:[#allocation5 + $0x1b0] sm:$0xff]
    %v160 = vld [vmem:[#allocation5 + $0x1b8] sm:$0xff]
    %v161 = vld [vmem:[#allocation5 + $0x1c0] sm:$0xff]
    %v162 = vld [vmem:[#allocation5 + $0x1c8] sm:$0xff]
    %v163 = vld [vmem:[#allocation5 + $0x1d0] sm:$0xff]
    %v164 = vld [vmem:[#allocation5 + $0x1d8] sm:$0xff]
    %v165 = vld [vmem:[#allocation5 + $0x1e0] sm:$0xff]
    %v166 = vld [vmem:[#allocation5 + $0x1e8] sm:$0xff]
    %v167 = vld [vmem:[#allocation5 + $0x1f0] sm:$0xff]
    %v168 = vld [vmem:[#allocation5 + $0x1f8] sm:$0xff]
    %v169 = vld [vmem:[%s2] sm:$0xf]
    %v171 = vlaneseq
    %v172 = vshrl.u32 %v171, 7
    %v173 = vsub.s32 0, %v172
    %v174 = vrot.slane %v169, %v173
    %v175 = vlaneseq
    %v176 = vshrl.u32 %v175, 7
    %v177 = vsub.s32 1, %v176
    %v178 = vrot.slane %v169, %v177
    %v179 = vlaneseq
    %v180 = vshrl.u32 %v179, 7
    %v181 = vsub.s32 2, %v180
    %v182 = vrot.slane %v169, %v181
    %v183 = vlaneseq
    %v184 = vshrl.u32 %v183, 7
    %v185 = vsub.s32 3, %v184
    %v186 = vrot.slane %v169, %v185
    %v193 = vunpack.c.l.b16 %v103
    %v194 = vunpack.c.h.b16 %v103
    %v195 = vunpack.c.l.b16 %v104
    %v196 = vunpack.c.h.b16 %v104
    %v197 = vpack.c.b16 %v195, %v193
    %v198 = vpack.c.b16 %v196, %v194
    %v265 = vunpack.c.l.b16 %v105
    %v266 = vunpack.c.h.b16 %v105
    %v267 = vunpack.c.l.b16 %v106
    %v268 = vunpack.c.h.b16 %v106
    %v269 = vunpack.c.l.b16 %v107
    %v270 = vunpack.c.h.b16 %v107
    %v271 = vunpack.c.l.b16 %v108
    %v272 = vunpack.c.h.b16 %v108
    %v273 = vunpack.c.l.b16 %v109
    %v274 = vunpack.c.h.b16 %v109
    %v275 = vunpack.c.l.b16 %v110
    %v276 = vunpack.c.h.b16 %v110
    %v277 = vunpack.c.l.b16 %v111
    %v278 = vunpack.c.h.b16 %v111
    %v279 = vunpack.c.l.b16 %v112
    %v280 = vunpack.c.h.b16 %v112
    %v281 = vunpack.c.l.b16 %v113
    %v282 = vunpack.c.h.b16 %v113
    %v283 = vunpack.c.l.b16 %v114
    %v284 = vunpack.c.h.b16 %v114
    %v285 = vunpack.c.l.b16 %v115
    %v286 = vunpack.c.h.b16 %v115
    %v287 = vunpack.c.l.b16 %v116
    %v288 = vunpack.c.h.b16 %v116
    %v289 = vunpack.c.l.b16 %v117
    %v290 = vunpack.c.h.b16 %v117
    %v291 = vunpack.c.l.b16 %v118
    %v292 = vunpack.c.h.b16 %v118
    %v293 = vunpack.c.l.b16 %v119
    %v294 = vunpack.c.h.b16 %v119
    %v295 = vunpack.c.l.b16 %v120
    %v296 = vunpack.c.h.b16 %v120
    %v297 = vunpack.c.l.b16 %v121
    %v298 = vunpack.c.h.b16 %v121
    %v299 = vunpack.c.l.b16 %v122
    %v300 = vunpack.c.h.b16 %v122
    %v301 = vunpack.c.l.b16 %v123
    %v302 = vunpack.c.h.b16 %v123
    %v303 = vunpack.c.l.b16 %v124
    %v304 = vunpack.c.h.b16 %v124
    %v305 = vunpack.c.l.b16 %v125
    %v306 = vunpack.c.h.b16 %v125
    %v307 = vunpack.c.l.b16 %v126
    %v308 = vunpack.c.h.b16 %v126
    %v309 = vunpack.c.l.b16 %v127
    %v310 = vunpack.c.h.b16 %v127
    %v311 = vunpack.c.l.b16 %v128
    %v312 = vunpack.c.h.b16 %v128
    %v313 = vunpack.c.l.b16 %v129
    %v314 = vunpack.c.h.b16 %v129
    %v315 = vunpack.c.l.b16 %v130
    %v316 = vunpack.c.h.b16 %v130
    %v317 = vunpack.c.l.b16 %v131
    %v318 = vunpack.c.h.b16 %v131
    %v319 = vunpack.c.l.b16 %v132
    %v320 = vunpack.c.h.b16 %v132
    %v321 = vunpack.c.l.b16 %v133
    %v322 = vunpack.c.h.b16 %v133
    %v323 = vunpack.c.l.b16 %v134
    %v324 = vunpack.c.h.b16 %v134
    %v325 = vunpack.c.l.b16 %v135
    %v326 = vunpack.c.h.b16 %v135
    %v327 = vunpack.c.l.b16 %v136
    %v328 = vunpack.c.h.b16 %v136
    %v329 = vunpack.c.l.b16 %v137
    %v330 = vunpack.c.h.b16 %v137
    %v331 = vunpack.c.l.b16 %v138
    %v332 = vunpack.c.h.b16 %v138
    %v333 = vunpack.c.l.b16 %v139
    %v334 = vunpack.c.h.b16 %v139
    %v335 = vunpack.c.l.b16 %v140
    %v336 = vunpack.c.h.b16 %v140
    %v337 = vunpack.c.l.b16 %v141
    %v338 = vunpack.c.h.b16 %v141
    %v339 = vunpack.c.l.b16 %v142
    %v340 = vunpack.c.h.b16 %v142
    %v341 = vunpack.c.l.b16 %v143
    %v342 = vunpack.c.h.b16 %v143
    %v343 = vunpack.c.l.b16 %v144
    %v344 = vunpack.c.h.b16 %v144
    %v345 = vunpack.c.l.b16 %v145
    %v346 = vunpack.c.h.b16 %v145
    %v347 = vunpack.c.l.b16 %v146
    %v348 = vunpack.c.h.b16 %v146
    %v349 = vunpack.c.l.b16 %v147
    %v350 = vunpack.c.h.b16 %v147
    %v351 = vunpack.c.l.b16 %v148
    %v352 = vunpack.c.h.b16 %v148
    %v353 = vunpack.c.l.b16 %v149
    %v354 = vunpack.c.h.b16 %v149
    %v355 = vunpack.c.l.b16 %v150
    %v356 = vunpack.c.h.b16 %v150
    %v357 = vunpack.c.l.b16 %v151
    %v358 = vunpack.c.h.b16 %v151
    %v359 = vunpack.c.l.b16 %v152
    %v360 = vunpack.c.h.b16 %v152
    %v361 = vunpack.c.l.b16 %v153
    %v362 = vunpack.c.h.b16 %v153
    %v363 = vunpack.c.l.b16 %v154
    %v364 = vunpack.c.h.b16 %v154
    %v365 = vunpack.c.l.b16 %v155
    %v366 = vunpack.c.h.b16 %v155
    %v367 = vunpack.c.l.b16 %v156
    %v368 = vunpack.c.h.b16 %v156
    %v369 = vunpack.c.l.b16 %v157
    %v370 = vunpack.c.h.b16 %v157
    %v371 = vunpack.c.l.b16 %v158
    %v372 = vunpack.c.h.b16 %v158
    %v373 = vunpack.c.l.b16 %v159
    %v374 = vunpack.c.h.b16 %v159
    %v375 = vunpack.c.l.b16 %v160
    %v376 = vunpack.c.h.b16 %v160
    %v377 = vunpack.c.l.b16 %v161
    %v378 = vunpack.c.h.b16 %v161
    %v379 = vunpack.c.l.b16 %v162
    %v380 = vunpack.c.h.b16 %v162
    %v381 = vunpack.c.l.b16 %v163
    %v382 = vunpack.c.h.b16 %v163
    %v383 = vunpack.c.l.b16 %v164
    %v384 = vunpack.c.h.b16 %v164
    %v385 = vunpack.c.l.b16 %v165
    %v386 = vunpack.c.h.b16 %v165
    %v387 = vunpack.c.l.b16 %v166
    %v388 = vunpack.c.h.b16 %v166
    %v389 = vunpack.c.l.b16 %v167
    %v390 = vunpack.c.h.b16 %v167
    %v391 = vunpack.c.l.b16 %v168
    %v392 = vunpack.c.h.b16 %v168
    %v393 = vpack.c.b16 %v269, %v265
    %v394 = vpack.c.b16 %v270, %v266
    %v395 = vpack.c.b16 %v271, %v267
    %v396 = vpack.c.b16 %v272, %v268
    %v397 = vpack.c.b16 %v277, %v273
    %v398 = vpack.c.b16 %v278, %v274
    %v399 = vpack.c.b16 %v279, %v275
    %v400 = vpack.c.b16 %v280, %v276
    %v401 = vpack.c.b16 %v285, %v281
    %v402 = vpack.c.b16 %v286, %v282
    %v403 = vpack.c.b16 %v287, %v283
    %v404 = vpack.c.b16 %v288, %v284
    %v405 = vpack.c.b16 %v293, %v289
    %v406 = vpack.c.b16 %v294, %v290
    %v407 = vpack.c.b16 %v295, %v291
    %v408 = vpack.c.b16 %v296, %v292
    %v409 = vpack.c.b16 %v301, %v297
    %v410 = vpack.c.b16 %v302, %v298
    %v411 = vpack.c.b16 %v303, %v299
    %v412 = vpack.c.b16 %v304, %v300
    %v413 = vpack.c.b16 %v309, %v305
    %v414 = vpack.c.b16 %v310, %v306
    %v415 = vpack.c.b16 %v311, %v307
    %v416 = vpack.c.b16 %v312, %v308
    %v417 = vpack.c.b16 %v317, %v313
    %v418 = vpack.c.b16 %v318, %v314
    %v419 = vpack.c.b16 %v319, %v315
    %v420 = vpack.c.b16 %v320, %v316
    %v421 = vpack.c.b16 %v325, %v321
    %v422 = vpack.c.b16 %v326, %v322
    %v423 = vpack.c.b16 %v327, %v323
    %v424 = vpack.c.b16 %v328, %v324
    %v425 = vpack.c.b16 %v333, %v329
    %v426 = vpack.c.b16 %v334, %v330
    %v427 = vpack.c.b16 %v335, %v331
    %v428 = vpack.c.b16 %v336, %v332
    %v429 = vpack.c.b16 %v341, %v337
    %v430 = vpack.c.b16 %v342, %v338
    %v431 = vpack.c.b16 %v343, %v339
    %v432 = vpack.c.b16 %v344, %v340
    %v433 = vpack.c.b16 %v349, %v345
    %v434 = vpack.c.b16 %v350, %v346
    %v435 = vpack.c.b16 %v351, %v347
    %v436 = vpack.c.b16 %v352, %v348
    %v437 = vpack.c.b16 %v357, %v353
    %v438 = vpack.c.b16 %v358, %v354
    %v439 = vpack.c.b16 %v359, %v355
    %v440 = vpack.c.b16 %v360, %v356
    %v441 = vpack.c.b16 %v365, %v361
    %v442 = vpack.c.b16 %v366, %v362
    %v443 = vpack.c.b16 %v367, %v363
    %v444 = vpack.c.b16 %v368, %v364
    %v445 = vpack.c.b16 %v373, %v369
    %v446 = vpack.c.b16 %v374, %v370
    %v447 = vpack.c.b16 %v375, %v371
    %v448 = vpack.c.b16 %v376, %v372
    %v449 = vpack.c.b16 %v381, %v377
    %v450 = vpack.c.b16 %v382, %v378
    %v451 = vpack.c.b16 %v383, %v379
    %v452 = vpack.c.b16 %v384, %v380
    %v453 = vpack.c.b16 %v389, %v385
    %v454 = vpack.c.b16 %v390, %v386
    %v455 = vpack.c.b16 %v391, %v387
    %v456 = vpack.c.b16 %v392, %v388
    %521 = vmatprep.subr.bf16.mxu0 %v394
    %522 = vmatpush1.bf16.msra.mxu0 %v393
    %523 = vmatprep.subr.bf16.mxu0 %v398
    %524 = vmatpush1.bf16.msra.mxu0 %v397
    %525 = vmatprep.subr.bf16.mxu0 %v402
    %526 = vmatpush1.bf16.msra.mxu0 %v401
    %527 = vmatprep.subr.bf16.mxu0 %v406
    %528 = vmatpush1.bf16.msra.mxu0 %v405
    %529 = vmatprep.subr.bf16.mxu0 %v410
    %530 = vmatpush1.bf16.msra.mxu0 %v409
    %531 = vmatprep.subr.bf16.mxu0 %v414
    %532 = vmatpush1.bf16.msra.mxu0 %v413
    %533 = vmatprep.subr.bf16.mxu0 %v418
    %534 = vmatpush1.bf16.msra.mxu0 %v417
    %535 = vmatprep.subr.bf16.mxu0 %v422
    %536 = vmatpush1.bf16.msra.mxu0 %v421
    %537 = vmatprep.subr.bf16.mxu0 %v426
    %538 = vmatpush1.bf16.msra.mxu0 %v425
    %539 = vmatprep.subr.bf16.mxu0 %v430
    %540 = vmatpush1.bf16.msra.mxu0 %v429
    %541 = vmatprep.subr.bf16.mxu0 %v434
    %542 = vmatpush1.bf16.msra.mxu0 %v433
    %543 = vmatprep.subr.bf16.mxu0 %v438
    %544 = vmatpush1.bf16.msra.mxu0 %v437
    %545 = vmatprep.subr.bf16.mxu0 %v442
    %546 = vmatpush1.bf16.msra.mxu0 %v441
    %547 = vmatprep.subr.bf16.mxu0 %v446
    %548 = vmatpush1.bf16.msra.mxu0 %v445
    %549 = vmatprep.subr.bf16.mxu0 %v450
    %550 = vmatpush1.bf16.msra.mxu0 %v449
    %551 = vmatprep.subr.bf16.mxu0 %v454
    %552 = vmatpush1.bf16.msra.mxu0 %v453
    %553 = vmatprep.mubr.bf16.mxu0 %v198
    %554 = vmatmul.mubr.bf16.gmra.mrb[0].mxu0 %v197
    %v555 = vpop.f32.mrb[0].mxu0
    %v556 = vadd.f32 %v174, %v555
    %v557 = vpop.f32.mrb[0].mxu0
    %v558 = vadd.f32 %v178, %v557
    %v559 = vpop.f32.mrb[0].mxu0
    %v560 = vadd.f32 %v174, %v559
    %v561 = vpop.f32.mrb[0].mxu0
    %v562 = vadd.f32 %v178, %v561
    %563 = vdwg.mxu0
    %564 = vmatprep.subr.bf16.mxu0 %v396
    %565 = vmatpush1.bf16.msra.mxu0 %v395
    %566 = vmatprep.subr.bf16.mxu0 %v400
    %567 = vmatpush1.bf16.msra.mxu0 %v399
    %568 = vmatprep.subr.bf16.mxu0 %v404
    %569 = vmatpush1.bf16.msra.mxu0 %v403
    %570 = vmatprep.subr.bf16.mxu0 %v408
    %571 = vmatpush1.bf16.msra.mxu0 %v407
    %572 = vmatprep.subr.bf16.mxu0 %v412
    %573 = vmatpush1.bf16.msra.mxu0 %v411
    %574 = vmatprep.subr.bf16.mxu0 %v416
    %575 = vmatpush1.bf16.msra.mxu0 %v415
    %576 = vmatprep.subr.bf16.mxu0 %v420
    %577 = vmatpush1.bf16.msra.mxu0 %v419
    %578 = vmatprep.subr.bf16.mxu0 %v424
    %579 = vmatpush1.bf16.msra.mxu0 %v423
    %580 = vmatprep.subr.bf16.mxu0 %v428
    %581 = vmatpush1.bf16.msra.mxu0 %v427
    %582 = vmatprep.subr.bf16.mxu0 %v432
    %583 = vmatpush1.bf16.msra.mxu0 %v431
    %584 = vmatprep.subr.bf16.mxu0 %v436
    %585 = vmatpush1.bf16.msra.mxu0 %v435
    %586 = vmatprep.subr.bf16.mxu0 %v440
    %587 = vmatpush1.bf16.msra.mxu0 %v439
    %588 = vmatprep.subr.bf16.mxu0 %v444
    %589 = vmatpush1.bf16.msra.mxu0 %v443
    %590 = vmatprep.subr.bf16.mxu0 %v448
    %591 = vmatpush1.bf16.msra.mxu0 %v447
    %592 = vmatprep.subr.bf16.mxu0 %v452
    %593 = vmatpush1.bf16.msra.mxu0 %v451
    %594 = vmatprep.subr.bf16.mxu0 %v456
    %595 = vmatpush1.bf16.msra.mxu0 %v455
    %596 = vmatprep.mubr.bf16.mxu0 %v198
    %597 = vmatmul.mubr.bf16.gmra.mrb[0].mxu0 %v197
    %v598 = vpop.f32.mrb[0].mxu0
    %v599 = vadd.f32 %v182, %v598
    %v600 = vpop.f32.mrb[0].mxu0
    %v601 = vadd.f32 %v186, %v600
    %v602 = vpop.f32.mrb[0].mxu0
    %v603 = vadd.f32 %v182, %v602
    %v604 = vpop.f32.mrb[0].mxu0
    %v605 = vadd.f32 %v186, %v604
    %606 = vdwg.mxu0
    %v607 = vpack.c.bf16 %v560, %v556
    %v608 = vpack.c.bf16 %v562, %v558
    %v609 = vpack.c.bf16 %v603, %v599
    %v610 = vpack.c.bf16 %v605, %v601
    %v611 = vtanh.bf16.pop %v607
    %v612 = vtanh.bf16.pop %v608
    %v613 = vtanh.bf16.pop %v609
    %v614 = vtanh.bf16.pop %v610
    %v615 = vld [vmem:[#allocation7] sm:$0xf]
    %v616 = vld [vmem:[#allocation7 + $0x4] sm:$0xf]
    %v617 = vld [vmem:[#allocation7 + $0x8] sm:$0xf]
    %v618 = vld [vmem:[#allocation7 + $0xc] sm:$0xf]
    %v619 = vld [vmem:[#allocation7 + $0x10] sm:$0xf]
    %v620 = vld [vmem:[#allocation7 + $0x14] sm:$0xf]
    %v621 = vld [vmem:[#allocation7 + $0x18] sm:$0xf]
    %v622 = vld [vmem:[#allocation7 + $0x1c] sm:$0xf]
    %v623 = vld [vmem:[#allocation7 + $0x20] sm:$0xf]
    %v624 = vld [vmem:[#allocation7 + $0x24] sm:$0xf]
    %v625 = vld [vmem:[#allocation7 + $0x28] sm:$0xf]
    %v626 = vld [vmem:[#allocation7 + $0x2c] sm:$0xf]
    %v627 = vld [vmem:[#allocation7 + $0x30] sm:$0xf]
    %v628 = vld [vmem:[#allocation7 + $0x34] sm:$0xf]
    %v629 = vld [vmem:[#allocation7 + $0x38] sm:$0xf]
    %v630 = vld [vmem:[#allocation7 + $0x3c] sm:$0xf]
    %v631 = vld [vmem:[#allocation7 + $0x40] sm:$0xf]
    %v632 = vld [vmem:[#allocation7 + $0x44] sm:$0xf]
    %v633 = vld [vmem:[#allocation7 + $0x48] sm:$0xf]
    %v634 = vld [vmem:[#allocation7 + $0x4c] sm:$0xf]
    %v635 = vld [vmem:[#allocation7 + $0x50] sm:$0xf]
    %v636 = vld [vmem:[#allocation7 + $0x54] sm:$0xf]
    %v637 = vld [vmem:[#allocation7 + $0x58] sm:$0xf]
    %v638 = vld [vmem:[#allocation7 + $0x5c] sm:$0xf]
    %v639 = vld [vmem:[#allocation7 + $0x60] sm:$0xf]
    %v640 = vld [vmem:[#allocation7 + $0x64] sm:$0xf]
    %v641 = vld [vmem:[#allocation7 + $0x68] sm:$0xf]
    %v642 = vld [vmem:[#allocation7 + $0x6c] sm:$0xf]
    %v643 = vld [vmem:[#allocation7 + $0x70] sm:$0xf]
    %v644 = vld [vmem:[#allocation7 + $0x74] sm:$0xf]
    %v645 = vld [vmem:[#allocation7 + $0x78] sm:$0xf]
    %v646 = vld [vmem:[#allocation7 + $0x7c] sm:$0xf]
    %v647 = vld [vmem:[#allocation7 + $0x80] sm:$0xf]
    %v648 = vld [vmem:[#allocation7 + $0x84] sm:$0xf]
    %v649 = vld [vmem:[#allocation7 + $0x88] sm:$0xf]
    %v650 = vld [vmem:[#allocation7 + $0x8c] sm:$0xf]
    %v651 = vld [vmem:[#allocation7 + $0x90] sm:$0xf]
    %v652 = vld [vmem:[#allocation7 + $0x94] sm:$0xf]
    %v653 = vld [vmem:[#allocation7 + $0x98] sm:$0xf]
    %v654 = vld [vmem:[#allocation7 + $0x9c] sm:$0xf]
    %v655 = vld [vmem:[#allocation7 + $0xa0] sm:$0xf]
    %v656 = vld [vmem:[#allocation7 + $0xa4] sm:$0xf]
    %v657 = vld [vmem:[#allocation7 + $0xa8] sm:$0xf]
    %v658 = vld [vmem:[#allocation7 + $0xac] sm:$0xf]
    %v659 = vld [vmem:[#allocation7 + $0xb0] sm:$0xf]
    %v660 = vld [vmem:[#allocation7 + $0xb4] sm:$0xf]
    %v661 = vld [vmem:[#allocation7 + $0xb8] sm:$0xf]
    %v662 = vld [vmem:[#allocation7 + $0xbc] sm:$0xf]
    %v663 = vld [vmem:[#allocation7 + $0xc0] sm:$0xf]
    %v664 = vld [vmem:[#allocation7 + $0xc4] sm:$0xf]
    %v665 = vld [vmem:[#allocation7 + $0xc8] sm:$0xf]
    %v666 = vld [vmem:[#allocation7 + $0xcc] sm:$0xf]
    %v667 = vld [vmem:[#allocation7 + $0xd0] sm:$0xf]
    %v668 = vld [vmem:[#allocation7 + $0xd4] sm:$0xf]
    %v669 = vld [vmem:[#allocation7 + $0xd8] sm:$0xf]
    %v670 = vld [vmem:[#allocation7 + $0xdc] sm:$0xf]
    %v671 = vld [vmem:[#allocation7 + $0xe0] sm:$0xf]
    %v672 = vld [vmem:[#allocation7 + $0xe4] sm:$0xf]
    %v673 = vld [vmem:[#allocation7 + $0xe8] sm:$0xf]
    %v674 = vld [vmem:[#allocation7 + $0xec] sm:$0xf]
    %v675 = vld [vmem:[#allocation7 + $0xf0] sm:$0xf]
    %v676 = vld [vmem:[#allocation7 + $0xf4] sm:$0xf]
    %v677 = vld [vmem:[#allocation7 + $0xf8] sm:$0xf]
    %v678 = vld [vmem:[#allocation7 + $0xfc] sm:$0xf]
    %v679 = vld [vmem:[%s4] sm:$0x1]
    %v681 = vlaneseq
    %v682 = vshrl.u32 %v681, 7
    %v683 = vsub.s32 0, %v682
    %v684 = vrot.slane %v679, %v683
    %v750 = vunpack.c.l.b16 %v615
    %v751 = vunpack.c.l.b16 %v616
    %v752 = vunpack.c.l.b16 %v617
    %v753 = vunpack.c.l.b16 %v618
    %v754 = vunpack.c.l.b16 %v619
    %v755 = vunpack.c.l.b16 %v620
    %v756 = vunpack.c.l.b16 %v621
    %v757 = vunpack.c.l.b16 %v622
    %v758 = vunpack.c.l.b16 %v623
    %v759 = vunpack.c.l.b16 %v624
    %v760 = vunpack.c.l.b16 %v625
    %v761 = vunpack.c.l.b16 %v626
    %v762 = vunpack.c.l.b16 %v627
    %v763 = vunpack.c.l.b16 %v628
    %v764 = vunpack.c.l.b16 %v629
    %v765 = vunpack.c.l.b16 %v630
    %v766 = vunpack.c.l.b16 %v631
    %v767 = vunpack.c.l.b16 %v632
    %v768 = vunpack.c.l.b16 %v633
    %v769 = vunpack.c.l.b16 %v634
    %v770 = vunpack.c.l.b16 %v635
    %v771 = vunpack.c.l.b16 %v636
    %v772 = vunpack.c.l.b16 %v637
    %v773 = vunpack.c.l.b16 %v638
    %v774 = vunpack.c.l.b16 %v639
    %v775 = vunpack.c.l.b16 %v640
    %v776 = vunpack.c.l.b16 %v641
    %v777 = vunpack.c.l.b16 %v642
    %v778 = vunpack.c.l.b16 %v643
    %v779 = vunpack.c.l.b16 %v644
    %v780 = vunpack.c.l.b16 %v645
    %v781 = vunpack.c.l.b16 %v646
    %v782 = vunpack.c.l.b16 %v647
    %v783 = vunpack.c.l.b16 %v648
    %v784 = vunpack.c.l.b16 %v649
    %v785 = vunpack.c.l.b16 %v650
    %v786 = vunpack.c.l.b16 %v651
    %v787 = vunpack.c.l.b16 %v652
    %v788 = vunpack.c.l.b16 %v653
    %v789 = vunpack.c.l.b16 %v654
    %v790 = vunpack.c.l.b16 %v655
    %v791 = vunpack.c.l.b16 %v656
    %v792 = vunpack.c.l.b16 %v657
    %v793 = vunpack.c.l.b16 %v658
    %v794 = vunpack.c.l.b16 %v659
    %v795 = vunpack.c.l.b16 %v660
    %v796 = vunpack.c.l.b16 %v661
    %v797 = vunpack.c.l.b16 %v662
    %v798 = vunpack.c.l.b16 %v663
    %v799 = vunpack.c.l.b16 %v664
    %v800 = vunpack.c.l.b16 %v665
    %v801 = vunpack.c.l.b16 %v666
    %v802 = vunpack.c.l.b16 %v667
    %v803 = vunpack.c.l.b16 %v668
    %v804 = vunpack.c.l.b16 %v669
    %v805 = vunpack.c.l.b16 %v670
    %v806 = vunpack.c.l.b16 %v671
    %v807 = vunpack.c.l.b16 %v672
    %v808 = vunpack.c.l.b16 %v673
    %v809 = vunpack.c.l.b16 %v674
    %v810 = vunpack.c.l.b16 %v675
    %v811 = vunpack.c.l.b16 %v676
    %v812 = vunpack.c.l.b16 %v677
    %v813 = vunpack.c.l.b16 %v678
    %v814 = vpack.c.b16 %v751, %v750
    %v815 = vpack.c.b16 %v753, %v752
    %v816 = vpack.c.b16 %v755, %v754
    %v817 = vpack.c.b16 %v757, %v756
    %v818 = vpack.c.b16 %v759, %v758
    %v819 = vpack.c.b16 %v761, %v760
    %v820 = vpack.c.b16 %v763, %v762
    %v821 = vpack.c.b16 %v765, %v764
    %v822 = vpack.c.b16 %v767, %v766
    %v823 = vpack.c.b16 %v769, %v768
    %v824 = vpack.c.b16 %v771, %v770
    %v825 = vpack.c.b16 %v773, %v772
    %v826 = vpack.c.b16 %v775, %v774
    %v827 = vpack.c.b16 %v777, %v776
    %v828 = vpack.c.b16 %v779, %v778
    %v829 = vpack.c.b16 %v781, %v780
    %v830 = vpack.c.b16 %v783, %v782
    %v831 = vpack.c.b16 %v785, %v784
    %v832 = vpack.c.b16 %v787, %v786
    %v833 = vpack.c.b16 %v789, %v788
    %v834 = vpack.c.b16 %v791, %v790
    %v835 = vpack.c.b16 %v793, %v792
    %v836 = vpack.c.b16 %v795, %v794
    %v837 = vpack.c.b16 %v797, %v796
    %v838 = vpack.c.b16 %v799, %v798
    %v839 = vpack.c.b16 %v801, %v800
    %v840 = vpack.c.b16 %v803, %v802
    %v841 = vpack.c.b16 %v805, %v804
    %v842 = vpack.c.b16 %v807, %v806
    %v843 = vpack.c.b16 %v809, %v808
    %v844 = vpack.c.b16 %v811, %v810
    %v845 = vpack.c.b16 %v813, %v812
    %878 = vmatprep.subr.bf16.mxu0 0
    %879 = vmatpush1.bf16.msra.mxu0 %v814
    %880 = vmatprep.subr.bf16.mxu0 0
    %881 = vmatpush1.bf16.msra.mxu0 %v815
    %882 = vmatprep.subr.bf16.mxu0 0
    %883 = vmatpush1.bf16.msra.mxu0 %v816
    %884 = vmatprep.subr.bf16.mxu0 0
    %885 = vmatpush1.bf16.msra.mxu0 %v817
    %886 = vmatprep.subr.bf16.mxu0 0
    %887 = vmatpush1.bf16.msra.mxu0 %v818
    %888 = vmatprep.subr.bf16.mxu0 0
    %889 = vmatpush1.bf16.msra.mxu0 %v819
    %890 = vmatprep.subr.bf16.mxu0 0
    %891 = vmatpush1.bf16.msra.mxu0 %v820
    %892 = vmatprep.subr.bf16.mxu0 0
    %893 = vmatpush1.bf16.msra.mxu0 %v821
    %894 = vmatprep.subr.bf16.mxu0 0
    %895 = vmatpush1.bf16.msra.mxu0 %v822
    %896 = vmatprep.subr.bf16.mxu0 0
    %897 = vmatpush1.bf16.msra.mxu0 %v823
    %898 = vmatprep.subr.bf16.mxu0 0
    %899 = vmatpush1.bf16.msra.mxu0 %v824
    %900 = vmatprep.subr.bf16.mxu0 0
    %901 = vmatpush1.bf16.msra.mxu0 %v825
    %902 = vmatprep.subr.bf16.mxu0 0
    %903 = vmatpush1.bf16.msra.mxu0 %v826
    %904 = vmatprep.subr.bf16.mxu0 0
    %905 = vmatpush1.bf16.msra.mxu0 %v827
    %906 = vmatprep.subr.bf16.mxu0 0
    %907 = vmatpush1.bf16.msra.mxu0 %v828
    %908 = vmatprep.subr.bf16.mxu0 0
    %909 = vmatpush1.bf16.msra.mxu0 %v829
    %910 = vmatprep.mubr.bf16.mxu0 %v612
    %911 = vmatmul.mubr.bf16.gmra.mrb[0].mxu0 %v611
    %v912 = vpop.f32.mrb[0].mxu0
    %v913 = vadd.f32 %v684, %v912
    %v914 = vpop.f32.mrb[0].mxu0
    %v915 = vpop.f32.mrb[0].mxu0
    %v916 = vadd.f32 %v684, %v915
    %v917 = vpop.f32.mrb[0].mxu0
    %918 = vdwg.mxu0
    %919 = vmatprep.subr.bf16.mxu0 0
    %920 = vmatpush1.bf16.msra.mxu0 %v830
    %921 = vmatprep.subr.bf16.mxu0 0
    %922 = vmatpush1.bf16.msra.mxu0 %v831
    %923 = vmatprep.subr.bf16.mxu0 0
    %924 = vmatpush1.bf16.msra.mxu0 %v832
    %925 = vmatprep.subr.bf16.mxu0 0
    %926 = vmatpush1.bf16.msra.mxu0 %v833
    %927 = vmatprep.subr.bf16.mxu0 0
    %928 = vmatpush1.bf16.msra.mxu0 %v834
    %929 = vmatprep.subr.bf16.mxu0 0
    %930 = vmatpush1.bf16.msra.mxu0 %v835
    %931 = vmatprep.subr.bf16.mxu0 0
    %932 = vmatpush1.bf16.msra.mxu0 %v836
    %933 = vmatprep.subr.bf16.mxu0 0
    %934 = vmatpush1.bf16.msra.mxu0 %v837
    %935 = vmatprep.subr.bf16.mxu0 0
    %936 = vmatpush1.bf16.msra.mxu0 %v838
    %937 = vmatprep.subr.bf16.mxu0 0
    %938 = vmatpush1.bf16.msra.mxu0 %v839
    %939 = vmatprep.subr.bf16.mxu0 0
    %940 = vmatpush1.bf16.msra.mxu0 %v840
    %941 = vmatprep.subr.bf16.mxu0 0
    %942 = vmatpush1.bf16.msra.mxu0 %v841
    %943 = vmatprep.subr.bf16.mxu0 0
    %944 = vmatpush1.bf16.msra.mxu0 %v842
    %945 = vmatprep.subr.bf16.mxu0 0
    %946 = vmatpush1.bf16.msra.mxu0 %v843
    %947 = vmatprep.subr.bf16.mxu0 0
    %948 = vmatpush1.bf16.msra.mxu0 %v844
    %949 = vmatprep.subr.bf16.mxu0 0
    %950 = vmatpush1.bf16.msra.mxu0 %v845
    %951 = vmatprep.mubr.bf16.mxu0 %v614
    %952 = vmatmul.mubr.bf16.gmra.mrb[0].mxu0 %v613
    %v953 = vpop.f32.mrb[0].mxu0
    %v954 = vadd.f32 %v913, %v953
    %v955 = vpop.f32.mrb[0].mxu0
    %v956 = vpop.f32.mrb[0].mxu0
    %v957 = vadd.f32 %v916, %v956
    %v958 = vpop.f32.mrb[0].mxu0
    %959 = vdwg.mxu0
    %v960 = vpack.c.bf16 %v957, %v954
    %v961 = vtanh.bf16.pop %v960
    %v962 = vld [vmem:[#allocation8] sm:$0xff]
    %v963 = vld [vmem:[#allocation8 + $0x8] sm:$0xff]
    %v964 = vld [vmem:[#allocation8 + $0x10] sm:$0xff]
    %v965 = vld [vmem:[#allocation8 + $0x18] sm:$0xff]
    %v966 = vld [vmem:[#allocation8 + $0x20] sm:$0xff]
    %v967 = vld [vmem:[#allocation8 + $0x28] sm:$0xff]
    %v968 = vld [vmem:[#allocation8 + $0x30] sm:$0xff]
    %v969 = vld [vmem:[#allocation8 + $0x38] sm:$0xff]
    %v970 = vld [vmem:[#allocation8 + $0x40] sm:$0xff]
    %v971 = vld [vmem:[#allocation8 + $0x48] sm:$0xff]
    %v972 = vld [vmem:[#allocation8 + $0x50] sm:$0xff]
    %v973 = vld [vmem:[#allocation8 + $0x58] sm:$0xff]
    %v974 = vld [vmem:[#allocation8 + $0x60] sm:$0xff]
    %v975 = vld [vmem:[#allocation8 + $0x68] sm:$0xff]
    %v976 = vld [vmem:[#allocation8 + $0x70] sm:$0xff]
    %v977 = vld [vmem:[#allocation8 + $0x78] sm:$0xff]
    %v978 = vld [vmem:[#allocation8 + $0x80] sm:$0xff]
    %v979 = vld [vmem:[#allocation8 + $0x88] sm:$0xff]
    %v980 = vld [vmem:[#allocation8 + $0x90] sm:$0xff]
    %v981 = vld [vmem:[#allocation8 + $0x98] sm:$0xff]
    %v982 = vld [vmem:[#allocation8 + $0xa0] sm:$0xff]
    %v983 = vld [vmem:[#allocation8 + $0xa8] sm:$0xff]
    %v984 = vld [vmem:[#allocation8 + $0xb0] sm:$0xff]
    %v985 = vld [vmem:[#allocation8 + $0xb8] sm:$0xff]
    %v986 = vld [vmem:[#allocation8 + $0xc0] sm:$0xff]
    %v987 = vld [vmem:[#allocation8 + $0xc8] sm:$0xff]
    %v988 = vld [vmem:[#allocation8 + $0xd0] sm:$0xff]
    %v989 = vld [vmem:[#allocation8 + $0xd8] sm:$0xff]
    %v990 = vld [vmem:[#allocation8 + $0xe0] sm:$0xff]
    %v991 = vld [vmem:[#allocation8 + $0xe8] sm:$0xff]
    %v992 = vld [vmem:[#allocation8 + $0xf0] sm:$0xff]
    %v993 = vld [vmem:[#allocation8 + $0xf8] sm:$0xff]
    %v994 = vld [vmem:[%s6] sm:$0xf]
    %v996 = vlaneseq
    %v997 = vshrl.u32 %v996, 7
    %v998 = vsub.s32 0, %v997
    %v999 = vrot.slane %v994, %v998
    %v1000 = vlaneseq
    %v1001 = vshrl.u32 %v1000, 7
    %v1002 = vsub.s32 1, %v1001
    %v1003 = vrot.slane %v994, %v1002
    %v1004 = vlaneseq
    %v1005 = vshrl.u32 %v1004, 7
    %v1006 = vsub.s32 2, %v1005
    %v1007 = vrot.slane %v994, %v1006
    %v1008 = vlaneseq
    %v1009 = vshrl.u32 %v1008, 7
    %v1010 = vsub.s32 3, %v1009
    %v1011 = vrot.slane %v994, %v1010
    %v1048 = vunpack.c.l.b16 %v962
    %v1049 = vunpack.c.h.b16 %v962
    %v1050 = vunpack.c.l.b16 %v963
    %v1051 = vunpack.c.h.b16 %v963
    %v1052 = vunpack.c.l.b16 %v964
    %v1053 = vunpack.c.h.b16 %v964
    %v1054 = vunpack.c.l.b16 %v965
    %v1055 = vunpack.c.h.b16 %v965
    %v1056 = vunpack.c.l.b16 %v966
    %v1057 = vunpack.c.h.b16 %v966
    %v1058 = vunpack.c.l.b16 %v967
    %v1059 = vunpack.c.h.b16 %v967
    %v1060 = vunpack.c.l.b16 %v968
    %v1061 = vunpack.c.h.b16 %v968
    %v1062 = vunpack.c.l.b16 %v969
    %v1063 = vunpack.c.h.b16 %v969
    %v1064 = vunpack.c.l.b16 %v970
    %v1065 = vunpack.c.h.b16 %v970
    %v1066 = vunpack.c.l.b16 %v971
    %v1067 = vunpack.c.h.b16 %v971
    %v1068 = vunpack.c.l.b16 %v972
    %v1069 = vunpack.c.h.b16 %v972
    %v1070 = vunpack.c.l.b16 %v973
    %v1071 = vunpack.c.h.b16 %v973
    %v1072 = vunpack.c.l.b16 %v974
    %v1073 = vunpack.c.h.b16 %v974
    %v1074 = vunpack.c.l.b16 %v975
    %v1075 = vunpack.c.h.b16 %v975
    %v1076 = vunpack.c.l.b16 %v976
    %v1077 = vunpack.c.h.b16 %v976
    %v1078 = vunpack.c.l.b16 %v977
    %v1079 = vunpack.c.h.b16 %v977
    %v1080 = vunpack.c.l.b16 %v978
    %v1081 = vunpack.c.h.b16 %v978
    %v1082 = vunpack.c.l.b16 %v979
    %v1083 = vunpack.c.h.b16 %v979
    %v1084 = vunpack.c.l.b16 %v980
    %v1085 = vunpack.c.h.b16 %v980
    %v1086 = vunpack.c.l.b16 %v981
    %v1087 = vunpack.c.h.b16 %v981
    %v1088 = vunpack.c.l.b16 %v982
    %v1089 = vunpack.c.h.b16 %v982
    %v1090 = vunpack.c.l.b16 %v983
    %v1091 = vunpack.c.h.b16 %v983
    %v1092 = vunpack.c.l.b16 %v984
    %v1093 = vunpack.c.h.b16 %v984
    %v1094 = vunpack.c.l.b16 %v985
    %v1095 = vunpack.c.h.b16 %v985
    %v1096 = vunpack.c.l.b16 %v986
    %v1097 = vunpack.c.h.b16 %v986
    %v1098 = vunpack.c.l.b16 %v987
    %v1099 = vunpack.c.h.b16 %v987
    %v1100 = vunpack.c.l.b16 %v988
    %v1101 = vunpack.c.h.b16 %v988
    %v1102 = vunpack.c.l.b16 %v989
    %v1103 = vunpack.c.h.b16 %v989
    %v1104 = vunpack.c.l.b16 %v990
    %v1105 = vunpack.c.h.b16 %v990
    %v1106 = vunpack.c.l.b16 %v991
    %v1107 = vunpack.c.h.b16 %v991
    %v1108 = vunpack.c.l.b16 %v992
    %v1109 = vunpack.c.h.b16 %v992
    %v1110 = vunpack.c.l.b16 %v993
    %v1111 = vunpack.c.h.b16 %v993
    %v1112 = vpack.c.b16 %v1052, %v1048
    %v1113 = vpack.c.b16 %v1053, %v1049
    %v1114 = vpack.c.b16 %v1054, %v1050
    %v1115 = vpack.c.b16 %v1055, %v1051
    %v1116 = vpack.c.b16 %v1060, %v1056
    %v1117 = vpack.c.b16 %v1061, %v1057
    %v1118 = vpack.c.b16 %v1062, %v1058
    %v1119 = vpack.c.b16 %v1063, %v1059
    %v1120 = vpack.c.b16 %v1068, %v1064
    %v1121 = vpack.c.b16 %v1069, %v1065
    %v1122 = vpack.c.b16 %v1070, %v1066
    %v1123 = vpack.c.b16 %v1071, %v1067
    %v1124 = vpack.c.b16 %v1076, %v1072
    %v1125 = vpack.c.b16 %v1077, %v1073
    %v1126 = vpack.c.b16 %v1078, %v1074
    %v1127 = vpack.c.b16 %v1079, %v1075
    %v1128 = vpack.c.b16 %v1084, %v1080
    %v1129 = vpack.c.b16 %v1085, %v1081
    %v1130 = vpack.c.b16 %v1086, %v1082
    %v1131 = vpack.c.b16 %v1087, %v1083
    %v1132 = vpack.c.b16 %v1092, %v1088
    %v1133 = vpack.c.b16 %v1093, %v1089
    %v1134 = vpack.c.b16 %v1094, %v1090
    %v1135 = vpack.c.b16 %v1095, %v1091
    %v1136 = vpack.c.b16 %v1100, %v1096
    %v1137 = vpack.c.b16 %v1101, %v1097
    %v1138 = vpack.c.b16 %v1102, %v1098
    %v1139 = vpack.c.b16 %v1103, %v1099
    %v1140 = vpack.c.b16 %v1108, %v1104
    %v1141 = vpack.c.b16 %v1109, %v1105
    %v1142 = vpack.c.b16 %v1110, %v1106
    %v1143 = vpack.c.b16 %v1111, %v1107
    %1176 = vmatprep.subr.bf16.mxu0 %v1113
    %1177 = vmatpush1.bf16.msra.mxu0 %v1112
    %1178 = vmatprep.subr.bf16.mxu0 %v1117
    %1179 = vmatpush1.bf16.msra.mxu0 %v1116
    %1180 = vmatprep.subr.bf16.mxu0 %v1121
    %1181 = vmatpush1.bf16.msra.mxu0 %v1120
    %1182 = vmatprep.subr.bf16.mxu0 %v1125
    %1183 = vmatpush1.bf16.msra.mxu0 %v1124
    %1184 = vmatprep.subr.bf16.mxu0 %v1129
    %1185 = vmatpush1.bf16.msra.mxu0 %v1128
    %1186 = vmatprep.subr.bf16.mxu0 %v1133
    %1187 = vmatpush1.bf16.msra.mxu0 %v1132
    %1188 = vmatprep.subr.bf16.mxu0 %v1137
    %1189 = vmatpush1.bf16.msra.mxu0 %v1136
    %1190 = vmatprep.subr.bf16.mxu0 %v1141
    %1191 = vmatpush1.bf16.msra.mxu0 %v1140
    %1192 = vmatprep.subr.bf16.mxu0 0
    %1193 = vmatpush1.bf16.msra.mxu0 0
    %1194 = vmatprep.subr.bf16.mxu0 0
    %1195 = vmatpush1.bf16.msra.mxu0 0
    %1196 = vmatprep.subr.bf16.mxu0 0
    %1197 = vmatpush1.bf16.msra.mxu0 0
    %1198 = vmatprep.subr.bf16.mxu0 0
    %1199 = vmatpush1.bf16.msra.mxu0 0
    %1200 = vmatprep.subr.bf16.mxu0 0
    %1201 = vmatpush1.bf16.msra.mxu0 0
    %1202 = vmatprep.subr.bf16.mxu0 0
    %1203 = vmatpush1.bf16.msra.mxu0 0
    %1204 = vmatprep.subr.bf16.mxu0 0
    %1205 = vmatpush1.bf16.msra.mxu0 0
    %1206 = vmatprep.subr.bf16.mxu0 0
    %1207 = vmatpush1.bf16.msra.mxu0 0
    %1208 = vmatprep.mubr.bf16.mxu0 0
    %1209 = vmatmul.mubr.bf16.gmra.mrb[0].mxu0 %v961
    %v1210 = vpop.f32.mrb[0].mxu0
    %v1211 = vadd.f32 %v999, %v1210
    %v1212 = vpop.f32.mrb[0].mxu0
    %v1213 = vadd.f32 %v1003, %v1212
    %v1214 = vpop.f32.mrb[0].mxu0
    %v1215 = vadd.f32 %v999, %v1214
    %v1216 = vpop.f32.mrb[0].mxu0
    %v1217 = vadd.f32 %v1003, %v1216
    %1218 = vdwg.mxu0
    %1219 = vmatprep.subr.bf16.mxu0 %v1115
    %1220 = vmatpush1.bf16.msra.mxu0 %v1114
    %1221 = vmatprep.subr.bf16.mxu0 %v1119
    %1222 = vmatpush1.bf16.msra.mxu0 %v1118
    %1223 = vmatprep.subr.bf16.mxu0 %v1123
    %1224 = vmatpush1.bf16.msra.mxu0 %v1122
    %1225 = vmatprep.subr.bf16.mxu0 %v1127
    %1226 = vmatpush1.bf16.msra.mxu0 %v1126
    %1227 = vmatprep.subr.bf16.mxu0 %v1131
    %1228 = vmatpush1.bf16.msra.mxu0 %v1130
    %1229 = vmatprep.subr.bf16.mxu0 %v1135
    %1230 = vmatpush1.bf16.msra.mxu0 %v1134
    %1231 = vmatprep.subr.bf16.mxu0 %v1139
    %1232 = vmatpush1.bf16.msra.mxu0 %v1138
    %1233 = vmatprep.subr.bf16.mxu0 %v1143
    %1234 = vmatpush1.bf16.msra.mxu0 %v1142
    %1235 = vmatprep.subr.bf16.mxu0 0
    %1236 = vmatpush1.bf16.msra.mxu0 0
    %1237 = vmatprep.subr.bf16.mxu0 0
    %1238 = vmatpush1.bf16.msra.mxu0 0
    %1239 = vmatprep.subr.bf16.mxu0 0
    %1240 = vmatpush1.bf16.msra.mxu0 0
    %1241 = vmatprep.subr.bf16.mxu0 0
    %1242 = vmatpush1.bf16.msra.mxu0 0
    %1243 = vmatprep.subr.bf16.mxu0 0
    %1244 = vmatpush1.bf16.msra.mxu0 0
    %1245 = vmatprep.subr.bf16.mxu0 0
    %1246 = vmatpush1.bf16.msra.mxu0 0
    %1247 = vmatprep.subr.bf16.mxu0 0
    %1248 = vmatpush1.bf16.msra.mxu0 0
    %1249 = vmatprep.subr.bf16.mxu0 0
    %1250 = vmatpush1.bf16.msra.mxu0 0
    %1251 = vmatprep.mubr.bf16.mxu0 0
    %1252 = vmatmul.mubr.bf16.gmra.mrb[0].mxu0 %v961
    %v1253 = vpop.f32.mrb[0].mxu0
    %v1254 = vadd.f32 %v1007, %v1253
    %v1255 = vpop.f32.mrb[0].mxu0
    %v1256 = vadd.f32 %v1011, %v1255
    %v1257 = vpop.f32.mrb[0].mxu0
    %v1258 = vadd.f32 %v1007, %v1257
    %v1259 = vpop.f32.mrb[0].mxu0
    %v1260 = vadd.f32 %v1011, %v1259
    %1261 = vdwg.mxu0
    %v1262 = vpack.c.bf16 %v1215, %v1211
    %v1263 = vpack.c.bf16 %v1217, %v1213
    %v1264 = vpack.c.bf16 %v1258, %v1254
    %v1265 = vpack.c.bf16 %v1260, %v1256
    %v1266 = vtanh.bf16.pop %v1262
    %v1267 = vtanh.bf16.pop %v1263
    %v1268 = vtanh.bf16.pop %v1264
    %v1269 = vtanh.bf16.pop %v1265
    %v1270 = vld [vmem:[#allocation10] sm:$0xff]
    %v1271 = vld [vmem:[#allocation10 + $0x8] sm:$0xff]
    %v1272 = vld [vmem:[#allocation10 + $0x10] sm:$0xff]
    %v1273 = vld [vmem:[#allocation10 + $0x18] sm:$0xff]
    %v1274 = vld [vmem:[#allocation10 + $0x20] sm:$0xff]
    %v1275 = vld [vmem:[#allocation10 + $0x28] sm:$0xff]
    %v1276 = vld [vmem:[#allocation10 + $0x30] sm:$0xff]
    %v1277 = vld [vmem:[#allocation10 + $0x38] sm:$0xff]
    %v1278 = vld [vmem:[#allocation10 + $0x40] sm:$0xff]
    %v1279 = vld [vmem:[#allocation10 + $0x48] sm:$0xff]
    %v1280 = vld [vmem:[#allocation10 + $0x50] sm:$0xff]
    %v1281 = vld [vmem:[#allocation10 + $0x58] sm:$0xff]
    %v1282 = vld [vmem:[#allocation10 + $0x60] sm:$0xff]
    %v1283 = vld [vmem:[#allocation10 + $0x68] sm:$0xff]
    %v1284 = vld [vmem:[#allocation10 + $0x70] sm:$0xff]
    %v1285 = vld [vmem:[#allocation10 + $0x78] sm:$0xff]
    %v1286 = vld [vmem:[#allocation10 + $0x80] sm:$0xff]
    %v1287 = vld [vmem:[#allocation10 + $0x88] sm:$0xff]
    %v1288 = vld [vmem:[#allocation10 + $0x90] sm:$0xff]
    %v1289 = vld [vmem:[#allocation10 + $0x98] sm:$0xff]
    %v1290 = vld [vmem:[#allocation10 + $0xa0] sm:$0xff]
    %v1291 = vld [vmem:[#allocation10 + $0xa8] sm:$0xff]
    %v1292 = vld [vmem:[#allocation10 + $0xb0] sm:$0xff]
    %v1293 = vld [vmem:[#allocation10 + $0xb8] sm:$0xff]
    %v1294 = vld [vmem:[#allocation10 + $0xc0] sm:$0xff]
    %v1295 = vld [vmem:[#allocation10 + $0xc8] sm:$0xff]
    %v1296 = vld [vmem:[#allocation10 + $0xd0] sm:$0xff]
    %v1297 = vld [vmem:[#allocation10 + $0xd8] sm:$0xff]
    %v1298 = vld [vmem:[#allocation10 + $0xe0] sm:$0xff]
    %v1299 = vld [vmem:[#allocation10 + $0xe8] sm:$0xff]
    %v1300 = vld [vmem:[#allocation10 + $0xf0] sm:$0xff]
    %v1301 = vld [vmem:[#allocation10 + $0xf8] sm:$0xff]
    %v1302 = vld [vmem:[#allocation10 + $0x100] sm:$0xff]
    %v1303 = vld [vmem:[#allocation10 + $0x108] sm:$0xff]
    %v1304 = vld [vmem:[#allocation10 + $0x110] sm:$0xff]
    %v1305 = vld [vmem:[#allocation10 + $0x118] sm:$0xff]
    %v1306 = vld [vmem:[#allocation10 + $0x120] sm:$0xff]
    %v1307 = vld [vmem:[#allocation10 + $0x128] sm:$0xff]
    %v1308 = vld [vmem:[#allocation10 + $0x130] sm:$0xff]
    %v1309 = vld [vmem:[#allocation10 + $0x138] sm:$0xff]
    %v1310 = vld [vmem:[#allocation10 + $0x140] sm:$0xff]
    %v1311 = vld [vmem:[#allocation10 + $0x148] sm:$0xff]
    %v1312 = vld [vmem:[#allocation10 + $0x150] sm:$0xff]
    %v1313 = vld [vmem:[#allocation10 + $0x158] sm:$0xff]
    %v1314 = vld [vmem:[#allocation10 + $0x160] sm:$0xff]
    %v1315 = vld [vmem:[#allocation10 + $0x168] sm:$0xff]
    %v1316 = vld [vmem:[#allocation10 + $0x170] sm:$0xff]
    %v1317 = vld [vmem:[#allocation10 + $0x178] sm:$0xff]
    %v1318 = vld [vmem:[#allocation10 + $0x180] sm:$0xff]
    %v1319 = vld [vmem:[#allocation10 + $0x188] sm:$0xff]
    %v1320 = vld [vmem:[#allocation10 + $0x190] sm:$0xff]
    %v1321 = vld [vmem:[#allocation10 + $0x198] sm:$0xff]
    %v1322 = vld [vmem:[#allocation10 + $0x1a0] sm:$0xff]
    %v1323 = vld [vmem:[#allocation10 + $0x1a8] sm:$0xff]
    %v1324 = vld [vmem:[#allocation10 + $0x1b0] sm:$0xff]
    %v1325 = vld [vmem:[#allocation10 + $0x1b8] sm:$0xff]
    %v1326 = vld [vmem:[#allocation10 + $0x1c0] sm:$0xff]
    %v1327 = vld [vmem:[#allocation10 + $0x1c8] sm:$0xff]
    %v1328 = vld [vmem:[#allocation10 + $0x1d0] sm:$0xff]
    %v1329 = vld [vmem:[#allocation10 + $0x1d8] sm:$0xff]
    %v1330 = vld [vmem:[#allocation10 + $0x1e0] sm:$0xff]
    %v1331 = vld [vmem:[#allocation10 + $0x1e8] sm:$0xff]
    %v1332 = vld [vmem:[#allocation10 + $0x1f0] sm:$0xff]
    %v1333 = vld [vmem:[#allocation10 + $0x1f8] sm:$0xff]
    %v1334 = vld [vmem:[%s8] sm:$0x3]
    %v1336 = vlaneseq
    %v1337 = vshrl.u32 %v1336, 7
    %v1338 = vsub.s32 0, %v1337
    %v1339 = vrot.slane %v1334, %v1338
    %v1340 = vlaneseq
    %v1341 = vshrl.u32 %v1340, 7
    %v1342 = vsub.s32 1, %v1341
    %v1343 = vrot.slane %v1334, %v1342
    %v1410 = vunpack.c.l.b16 %v1270
    %v1411 = vunpack.c.h.b16 %v1270
    %v1412 = vunpack.c.l.b16 %v1271
    %v1413 = vunpack.c.h.b16 %v1271
    %v1414 = vunpack.c.l.b16 %v1272
    %v1415 = vunpack.c.h.b16 %v1272
    %v1416 = vunpack.c.l.b16 %v1273
    %v1417 = vunpack.c.h.b16 %v1273
    %v1418 = vunpack.c.l.b16 %v1274
    %v1419 = vunpack.c.h.b16 %v1274
    %v1420 = vunpack.c.l.b16 %v1275
    %v1421 = vunpack.c.h.b16 %v1275
    %v1422 = vunpack.c.l.b16 %v1276
    %v1423 = vunpack.c.h.b16 %v1276
    %v1424 = vunpack.c.l.b16 %v1277
    %v1425 = vunpack.c.h.b16 %v1277
    %v1426 = vunpack.c.l.b16 %v1278
    %v1427 = vunpack.c.h.b16 %v1278
    %v1428 = vunpack.c.l.b16 %v1279
    %v1429 = vunpack.c.h.b16 %v1279
    %v1430 = vunpack.c.l.b16 %v1280
    %v1431 = vunpack.c.h.b16 %v1280
    %v1432 = vunpack.c.l.b16 %v1281
    %v1433 = vunpack.c.h.b16 %v1281
    %v1434 = vunpack.c.l.b16 %v1282
    %v1435 = vunpack.c.h.b16 %v1282
    %v1436 = vunpack.c.l.b16 %v1283
    %v1437 = vunpack.c.h.b16 %v1283
    %v1438 = vunpack.c.l.b16 %v1284
    %v1439 = vunpack.c.h.b16 %v1284
    %v1440 = vunpack.c.l.b16 %v1285
    %v1441 = vunpack.c.h.b16 %v1285
    %v1442 = vunpack.c.l.b16 %v1286
    %v1443 = vunpack.c.h.b16 %v1286
    %v1444 = vunpack.c.l.b16 %v1287
    %v1445 = vunpack.c.h.b16 %v1287
    %v1446 = vunpack.c.l.b16 %v1288
    %v1447 = vunpack.c.h.b16 %v1288
    %v1448 = vunpack.c.l.b16 %v1289
    %v1449 = vunpack.c.h.b16 %v1289
    %v1450 = vunpack.c.l.b16 %v1290
    %v1451 = vunpack.c.h.b16 %v1290
    %v1452 = vunpack.c.l.b16 %v1291
    %v1453 = vunpack.c.h.b16 %v1291
    %v1454 = vunpack.c.l.b16 %v1292
    %v1455 = vunpack.c.h.b16 %v1292
    %v1456 = vunpack.c.l.b16 %v1293
    %v1457 = vunpack.c.h.b16 %v1293
    %v1458 = vunpack.c.l.b16 %v1294
    %v1459 = vunpack.c.h.b16 %v1294
    %v1460 = vunpack.c.l.b16 %v1295
    %v1461 = vunpack.c.h.b16 %v1295
    %v1462 = vunpack.c.l.b16 %v1296
    %v1463 = vunpack.c.h.b16 %v1296
    %v1464 = vunpack.c.l.b16 %v1297
    %v1465 = vunpack.c.h.b16 %v1297
    %v1466 = vunpack.c.l.b16 %v1298
    %v1467 = vunpack.c.h.b16 %v1298
    %v1468 = vunpack.c.l.b16 %v1299
    %v1469 = vunpack.c.h.b16 %v1299
    %v1470 = vunpack.c.l.b16 %v1300
    %v1471 = vunpack.c.h.b16 %v1300
    %v1472 = vunpack.c.l.b16 %v1301
    %v1473 = vunpack.c.h.b16 %v1301
    %v1474 = vunpack.c.l.b16 %v1302
    %v1475 = vunpack.c.h.b16 %v1302
    %v1476 = vunpack.c.l.b16 %v1303
    %v1477 = vunpack.c.h.b16 %v1303
    %v1478 = vunpack.c.l.b16 %v1304
    %v1479 = vunpack.c.h.b16 %v1304
    %v1480 = vunpack.c.l.b16 %v1305
    %v1481 = vunpack.c.h.b16 %v1305
    %v1482 = vunpack.c.l.b16 %v1306
    %v1483 = vunpack.c.h.b16 %v1306
    %v1484 = vunpack.c.l.b16 %v1307
    %v1485 = vunpack.c.h.b16 %v1307
    %v1486 = vunpack.c.l.b16 %v1308
    %v1487 = vunpack.c.h.b16 %v1308
    %v1488 = vunpack.c.l.b16 %v1309
    %v1489 = vunpack.c.h.b16 %v1309
    %v1490 = vunpack.c.l.b16 %v1310
    %v1491 = vunpack.c.h.b16 %v1310
    %v1492 = vunpack.c.l.b16 %v1311
    %v1493 = vunpack.c.h.b16 %v1311
    %v1494 = vunpack.c.l.b16 %v1312
    %v1495 = vunpack.c.h.b16 %v1312
    %v1496 = vunpack.c.l.b16 %v1313
    %v1497 = vunpack.c.h.b16 %v1313
    %v1498 = vunpack.c.l.b16 %v1314
    %v1499 = vunpack.c.h.b16 %v1314
    %v1500 = vunpack.c.l.b16 %v1315
    %v1501 = vunpack.c.h.b16 %v1315
    %v1502 = vunpack.c.l.b16 %v1316
    %v1503 = vunpack.c.h.b16 %v1316
    %v1504 = vunpack.c.l.b16 %v1317
    %v1505 = vunpack.c.h.b16 %v1317
    %v1506 = vunpack.c.l.b16 %v1318
    %v1507 = vunpack.c.h.b16 %v1318
    %v1508 = vunpack.c.l.b16 %v1319
    %v1509 = vunpack.c.h.b16 %v1319
    %v1510 = vunpack.c.l.b16 %v1320
    %v1511 = vunpack.c.h.b16 %v1320
    %v1512 = vunpack.c.l.b16 %v1321
    %v1513 = vunpack.c.h.b16 %v1321
    %v1514 = vunpack.c.l.b16 %v1322
    %v1515 = vunpack.c.h.b16 %v1322
    %v1516 = vunpack.c.l.b16 %v1323
    %v1517 = vunpack.c.h.b16 %v1323
    %v1518 = vunpack.c.l.b16 %v1324
    %v1519 = vunpack.c.h.b16 %v1324
    %v1520 = vunpack.c.l.b16 %v1325
    %v1521 = vunpack.c.h.b16 %v1325
    %v1522 = vunpack.c.l.b16 %v1326
    %v1523 = vunpack.c.h.b16 %v1326
    %v1524 = vunpack.c.l.b16 %v1327
    %v1525 = vunpack.c.h.b16 %v1327
    %v1526 = vunpack.c.l.b16 %v1328
    %v1527 = vunpack.c.h.b16 %v1328
    %v1528 = vunpack.c.l.b16 %v1329
    %v1529 = vunpack.c.h.b16 %v1329
    %v1530 = vunpack.c.l.b16 %v1330
    %v1531 = vunpack.c.h.b16 %v1330
    %v1532 = vunpack.c.l.b16 %v1331
    %v1533 = vunpack.c.h.b16 %v1331
    %v1534 = vunpack.c.l.b16 %v1332
    %v1535 = vunpack.c.h.b16 %v1332
    %v1536 = vunpack.c.l.b16 %v1333
    %v1537 = vunpack.c.h.b16 %v1333
    %v1538 = vpack.c.b16 %v1412, %v1410
    %v1539 = vpack.c.b16 %v1413, %v1411
    %v1540 = vpack.c.b16 %v1416, %v1414
    %v1541 = vpack.c.b16 %v1417, %v1415
    %v1542 = vpack.c.b16 %v1420, %v1418
    %v1543 = vpack.c.b16 %v1421, %v1419
    %v1544 = vpack.c.b16 %v1424, %v1422
    %v1545 = vpack.c.b16 %v1425, %v1423
    %v1546 = vpack.c.b16 %v1428, %v1426
    %v1547 = vpack.c.b16 %v1429, %v1427
    %v1548 = vpack.c.b16 %v1432, %v1430
    %v1549 = vpack.c.b16 %v1433, %v1431
    %v1550 = vpack.c.b16 %v1436, %v1434
    %v1551 = vpack.c.b16 %v1437, %v1435
    %v1552 = vpack.c.b16 %v1440, %v1438
    %v1553 = vpack.c.b16 %v1441, %v1439
    %v1554 = vpack.c.b16 %v1444, %v1442
    %v1555 = vpack.c.b16 %v1445, %v1443
    %v1556 = vpack.c.b16 %v1448, %v1446
    %v1557 = vpack.c.b16 %v1449, %v1447
    %v1558 = vpack.c.b16 %v1452, %v1450
    %v1559 = vpack.c.b16 %v1453, %v1451
    %v1560 = vpack.c.b16 %v1456, %v1454
    %v1561 = vpack.c.b16 %v1457, %v1455
    %v1562 = vpack.c.b16 %v1460, %v1458
    %v1563 = vpack.c.b16 %v1461, %v1459
    %v1564 = vpack.c.b16 %v1464, %v1462
    %v1565 = vpack.c.b16 %v1465, %v1463
    %v1566 = vpack.c.b16 %v1468, %v1466
    %v1567 = vpack.c.b16 %v1469, %v1467
    %v1568 = vpack.c.b16 %v1472, %v1470
    %v1569 = vpack.c.b16 %v1473, %v1471
    %v1570 = vpack.c.b16 %v1476, %v1474
    %v1571 = vpack.c.b16 %v1477, %v1475
    %v1572 = vpack.c.b16 %v1480, %v1478
    %v1573 = vpack.c.b16 %v1481, %v1479
    %v1574 = vpack.c.b16 %v1484, %v1482
    %v1575 = vpack.c.b16 %v1485, %v1483
    %v1576 = vpack.c.b16 %v1488, %v1486
    %v1577 = vpack.c.b16 %v1489, %v1487
    %v1578 = vpack.c.b16 %v1492, %v1490
    %v1579 = vpack.c.b16 %v1493, %v1491
    %v1580 = vpack.c.b16 %v1496, %v1494
    %v1581 = vpack.c.b16 %v1497, %v1495
    %v1582 = vpack.c.b16 %v1500, %v1498
    %v1583 = vpack.c.b16 %v1501, %v1499
    %v1584 = vpack.c.b16 %v1504, %v1502
    %v1585 = vpack.c.b16 %v1505, %v1503
    %v1586 = vpack.c.b16 %v1508, %v1506
    %v1587 = vpack.c.b16 %v1509, %v1507
    %v1588 = vpack.c.b16 %v1512, %v1510
    %v1589 = vpack.c.b16 %v1513, %v1511
    %v1590 = vpack.c.b16 %v1516, %v1514
    %v1591 = vpack.c.b16 %v1517, %v1515
    %v1592 = vpack.c.b16 %v1520, %v1518
    %v1593 = vpack.c.b16 %v1521, %v1519
    %v1594 = vpack.c.b16 %v1524, %v1522
    %v1595 = vpack.c.b16 %v1525, %v1523
    %v1596 = vpack.c.b16 %v1528, %v1526
    %v1597 = vpack.c.b16 %v1529, %v1527
    %v1598 = vpack.c.b16 %v1532, %v1530
    %v1599 = vpack.c.b16 %v1533, %v1531
    %v1600 = vpack.c.b16 %v1536, %v1534
    %v1601 = vpack.c.b16 %v1537, %v1535
    %1666 = vmatprep.subr.bf16.mxu0 %v1539
    %1667 = vmatpush1.bf16.msra.mxu0 %v1538
    %1668 = vmatprep.subr.bf16.mxu0 %v1541
    %1669 = vmatpush1.bf16.msra.mxu0 %v1540
    %1670 = vmatprep.subr.bf16.mxu0 %v1543
    %1671 = vmatpush1.bf16.msra.mxu0 %v1542
    %1672 = vmatprep.subr.bf16.mxu0 %v1545
    %1673 = vmatpush1.bf16.msra.mxu0 %v1544
    %1674 = vmatprep.subr.bf16.mxu0 %v1547
    %1675 = vmatpush1.bf16.msra.mxu0 %v1546
    %1676 = vmatprep.subr.bf16.mxu0 %v1549
    %1677 = vmatpush1.bf16.msra.mxu0 %v1548
    %1678 = vmatprep.subr.bf16.mxu0 %v1551
    %1679 = vmatpush1.bf16.msra.mxu0 %v1550
    %1680 = vmatprep.subr.bf16.mxu0 %v1553
    %1681 = vmatpush1.bf16.msra.mxu0 %v1552
    %1682 = vmatprep.subr.bf16.mxu0 %v1555
    %1683 = vmatpush1.bf16.msra.mxu0 %v1554
    %1684 = vmatprep.subr.bf16.mxu0 %v1557
    %1685 = vmatpush1.bf16.msra.mxu0 %v1556
    %1686 = vmatprep.subr.bf16.mxu0 %v1559
    %1687 = vmatpush1.bf16.msra.mxu0 %v1558
    %1688 = vmatprep.subr.bf16.mxu0 %v1561
    %1689 = vmatpush1.bf16.msra.mxu0 %v1560
    %1690 = vmatprep.subr.bf16.mxu0 %v1563
    %1691 = vmatpush1.bf16.msra.mxu0 %v1562
    %1692 = vmatprep.subr.bf16.mxu0 %v1565
    %1693 = vmatpush1.bf16.msra.mxu0 %v1564
    %1694 = vmatprep.subr.bf16.mxu0 %v1567
    %1695 = vmatpush1.bf16.msra.mxu0 %v1566
    %1696 = vmatprep.subr.bf16.mxu0 %v1569
    %1697 = vmatpush1.bf16.msra.mxu0 %v1568
    %1698 = vmatprep.mubr.bf16.mxu0 %v1267
    %1699 = vmatmul.mubr.bf16.gmra.mrb[0].mxu0 %v1266
    %v1700 = vpop.f32.mrb[0].mxu0
    %v1701 = vadd.f32 %v1339, %v1700
    %v1702 = vpop.f32.mrb[0].mxu0
    %v1703 = vadd.f32 %v1343, %v1702
    %v1704 = vpop.f32.mrb[0].mxu0
    %v1705 = vadd.f32 %v1339, %v1704
    %v1706 = vpop.f32.mrb[0].mxu0
    %v1707 = vadd.f32 %v1343, %v1706
    %1708 = vdwg.mxu0
    %1709 = vmatprep.subr.bf16.mxu0 %v1571
    %1710 = vmatpush1.bf16.msra.mxu0 %v1570
    %1711 = vmatprep.subr.bf16.mxu0 %v1573
    %1712 = vmatpush1.bf16.msra.mxu0 %v1572
    %1713 = vmatprep.subr.bf16.mxu0 %v1575
    %1714 = vmatpush1.bf16.msra.mxu0 %v1574
    %1715 = vmatprep.subr.bf16.mxu0 %v1577
    %1716 = vmatpush1.bf16.msra.mxu0 %v1576
    %1717 = vmatprep.subr.bf16.mxu0 %v1579
    %1718 = vmatpush1.bf16.msra.mxu0 %v1578
    %1719 = vmatprep.subr.bf16.mxu0 %v1581
    %1720 = vmatpush1.bf16.msra.mxu0 %v1580
    %1721 = vmatprep.subr.bf16.mxu0 %v1583
    %1722 = vmatpush1.bf16.msra.mxu0 %v1582
    %1723 = vmatprep.subr.bf16.mxu0 %v1585
    %1724 = vmatpush1.bf16.msra.mxu0 %v1584
    %1725 = vmatprep.subr.bf16.mxu0 %v1587
    %1726 = vmatpush1.bf16.msra.mxu0 %v1586
    %1727 = vmatprep.subr.bf16.mxu0 %v1589
    %1728 = vmatpush1.bf16.msra.mxu0 %v1588
    %1729 = vmatprep.subr.bf16.mxu0 %v1591
    %1730 = vmatpush1.bf16.msra.mxu0 %v1590
    %1731 = vmatprep.subr.bf16.mxu0 %v1593
    %1732 = vmatpush1.bf16.msra.mxu0 %v1592
    %1733 = vmatprep.subr.bf16.mxu0 %v1595
    %1734 = vmatpush1.bf16.msra.mxu0 %v1594
    %1735 = vmatprep.subr.bf16.mxu0 %v1597
    %1736 = vmatpush1.bf16.msra.mxu0 %v1596
    %1737 = vmatprep.subr.bf16.mxu0 %v1599
    %1738 = vmatpush1.bf16.msra.mxu0 %v1598
    %1739 = vmatprep.subr.bf16.mxu0 %v1601
    %1740 = vmatpush1.bf16.msra.mxu0 %v1600
    %1741 = vmatprep.mubr.bf16.mxu0 %v1269
    %1742 = vmatmul.mubr.bf16.gmra.mrb[0].mxu0 %v1268
    %v1743 = vpop.f32.mrb[0].mxu0
    %v1744 = vadd.f32 %v1701, %v1743
    %v1745 = vpop.f32.mrb[0].mxu0
    %v1746 = vadd.f32 %v1703, %v1745
    %v1747 = vpop.f32.mrb[0].mxu0
    %v1748 = vadd.f32 %v1705, %v1747
    %v1749 = vpop.f32.mrb[0].mxu0
    %v1750 = vadd.f32 %v1707, %v1749
    %1751 = vdwg.mxu0
    %v1752 = vpack.c.bf16 %v1748, %v1744
    %v1753 = vpack.c.bf16 %v1750, %v1746
    %v1754 = vxor.u32 %v1752, 2147516416
    %v1755 = vxor.u32 %v1753, 2147516416
    %v1757 = vmul.bf16 %v1754, 1069105081
    %v1758 = vpow.bf16.pop %v1757
    %v1760 = vmul.bf16 %v1755, 1069105081
    %v1761 = vpow.bf16.pop %v1760
    %v1762 = vadd.bf16 %v1758, 1065369472
    %v1763 = vadd.bf16 %v1761, 1065369472
    %v1764 = vrcp.bf16.pop %v1762
    %v1765 = vmul.bf16 1065369472, %v1764
    %v1766 = vrcp.bf16.pop %v1763
    %v1767 = vmul.bf16 1065369472, %v1766
    %v1768 = vunpack.c.l.bf16 %v1765
    %v1769 = vunpack.c.l.bf16 %v1767
    %v1770 = vunpack.c.h.bf16 %v1765
    %v1771 = vunpack.c.h.bf16 %v1767
    %1772 = vst [vmem:[#allocation11] sm:$0xff] %v1768
    %1773 = vst [vmem:[#allocation11 + $0x8] sm:$0xff] %v1769
    %1774 = vst [vmem:[#allocation11 + $0x10] sm:$0xff] %v1770
    %1775 = vst [vmem:[#allocation11 + $0x18] sm:$0xff] %v1771
    // Predicated region
    $region58: #{tpu_custom_call.1} parent=1 // pred_check
      _
    $region59: #{tpu_custom_call.1} parent=1 // pred_check_branch
      %1777 = sbr.rel (0) target = $region61
    $region60: #{tpu_custom_call.1} parent=1 // pred_region
      %s1779 = ssub.s32 512, 512
      %1780 = vsyncadd [#allocation4], %s1779
      %s1781 = sshll.u32 [#allocation11], 4
      %s1782 = int_to_ptr.vmem [resolvable:$true] %s1781
      %1787 = dma.vmem_to_hbm [thread:$0]  %s1782, 512, %s9, [#allocation4], 256, 256, 16
    $region61: #{tpu_custom_call.1} parent=1 // pred_fallthru
      _
    // Predicated region
    $region62: #{tpu_custom_call.1} parent=1 // pred_check
      _
    $region63: #{tpu_custom_call.1} parent=1 // pred_check_branch
      %1789 = sbr.rel (0) target = $region65
    $region64: #{tpu_custom_call.1} parent=1 // pred_region
      %1790 = dma.done [#allocation4], 512
    $region65: #{tpu_custom_call.1} parent=1 // pred_fallthru
      _
    %1791 = vsyncpa [#allocation3], 1
    %1792 = vsyncpa [#allocation6], 1
    %1793 = vsyncpa [#allocation9], 1
    %1794 = vsyncpa [#allocation4], 1

</llo_original>
